<compile_context>
chip_gen: v7x
topology: tpu7x:2x2x1
jax: 0.10.0
libtpu: 0.0.40
codegen_flags: <defaults>
</compile_context>

<pallas_src>
import functools

import jax
import jax.numpy as jnp
from jax.experimental import pallas as pl
from jax.experimental.pallas import tpu as pltpu

C_PAD = 128          # lane-dense padded class dimension (sliced back outside)
_NEG = -1e30         # finite "minus infinity" for padded classes


# ----------------------------------------------------------------------------
# Fused kernel: whole forward for one graph-batch per grid step.
# ----------------------------------------------------------------------------
def _make_fused_kernel(num_layers, nhid, num_graphs, c_pad):
    H = nhid

    def kernel(a_ref, x_ref, mgn_ref, memnt_ref, cw_ref, cb_ref, hw_ref, hb_ref,
               o_ref):
        f32 = jnp.float32
        a = a_ref[0]            # (N, N) normalized adjacency for this graph-batch
        x = x_ref[0]            # (N, H) node features (F padded to H with zeros)
        mgn = mgn_ref[0]        # (G, N) row-normalized batch mask (mean pool)
        memnt = memnt_ref[0]    # (N, G) binary membership mask     (max pool)

        cb = cb_ref[...]        # (L, H)
        hw = hw_ref[...]        # (2H + 2*c_pad, c_pad) packed lin1 | lin2 | lin3
        hb = hb_ref[...]        # (3, c_pad)            packed b1 | b2 | b3

        x_mx = jnp.zeros((num_graphs, H), f32)
        x_mean = jnp.zeros((num_graphs, H), f32)

        for l in range(num_layers):
            w = cw_ref[l]                                        # (H, H)
            h = jnp.dot(a, jnp.dot(x, w, preferred_element_type=f32),
                        preferred_element_type=f32) + cb[l:l + 1, :]
            x = jnp.maximum(h, 0.0)                              # relu(GCN(x)); NoPool = id

            # mean pool: one MXU matmul with the pre-normalized mask
            mean = jnp.dot(mgn, x, preferred_element_type=f32)   # (G, H)

            # max pool: per-graph 2-D masked max. x >= 0 (post-relu), so a
            # multiplicative binary mask is exact and no -inf appears.
            rows = []
            for g in range(num_graphs):
                col = memnt[:, g:g + 1]                          # (N, 1) static lane slice
                rows.append(jnp.max(x * col, axis=0, keepdims=True))
            mx = jnp.concatenate(rows, axis=0)                   # (G, H)

            # relu distributes over the (removed) concat -> two accumulators
            x_mx = x_mx + jnp.maximum(mx, 0.0)
            x_mean = x_mean + jnp.maximum(mean, 0.0)

        # classifier head: W1 split into two static row-slices (no lane concat),
        # every matmul lane-padded to c_pad so the final store is unmasked.
        w1a = hw[0:H, :]                                         # gmp half of lin1
        w1b = hw[H:2 * H, :]                                     # gap half of lin1
        w2 = hw[2 * H:2 * H + c_pad, :]
        w3 = hw[2 * H + c_pad:2 * H + 2 * c_pad, :]

        h1 = jnp.maximum(
            jnp.dot(x_mx, w1a, preferred_element_type=f32)
            + jnp.dot(x_mean, w1b, preferred_element_type=f32)
            + hb[0:1, :], 0.0)                                   # (G, c_pad)
        h2 = jnp.maximum(jnp.dot(h1, w2, preferred_element_type=f32)
                         + hb[1:2, :], 0.0)
        logits = jnp.dot(h2, w3, preferred_element_type=f32) + hb[2:3, :]

        # stable log_softmax; padded classes carry -1e30 bias -> exp underflows to 0
        m = jnp.max(logits, axis=-1, keepdims=True)
        lse = m + jnp.log(jnp.sum(jnp.exp(logits - m), axis=-1, keepdims=True))
        o_ref[0] = logits - lse

    return kernel


def model_forward(a_norm, x_pad, mgn, mem_nt, packed, *, num_layers, nhid,
                  num_classes):
    conv_w, conv_b, head_w, head_b = packed
    B, N, _ = a_norm.shape
    G = mgn.shape[1]
    c_pad = head_w.shape[1]

    kernel = _make_fused_kernel(num_layers, nhid, G, c_pad)
    out = pl.pallas_call(
        kernel,
        out_shape=jax.ShapeDtypeStruct((B, G, c_pad), jnp.float32),
        grid=(B,),
        in_specs=[
            # streamed per grid step (one graph-batch each)
            pl.BlockSpec((1, N, N), lambda b: (b, 0, 0)),
            pl.BlockSpec((1, N, nhid), lambda b: (b, 0, 0)),
            pl.BlockSpec((1, G, N), lambda b: (b, 0, 0)),
            pl.BlockSpec((1, N, G), lambda b: (b, 0, 0)),
            # weights: constant block index -> resident in VMEM across steps
            pl.BlockSpec(conv_w.shape, lambda b: (0, 0, 0)),
            pl.BlockSpec(conv_b.shape, lambda b: (0, 0)),
            pl.BlockSpec(head_w.shape, lambda b: (0, 0)),
            pl.BlockSpec(head_b.shape, lambda b: (0, 0)),
        ],
        out_specs=pl.BlockSpec((1, G, c_pad), lambda b: (b, 0, 0)),
        compiler_params=pltpu.CompilerParams(
            dimension_semantics=("parallel",)),
    )(a_norm, x_pad, mgn, mem_nt, conv_w, conv_b, head_w, head_b)
    return out[:, :, :num_classes]


# ----------------------------------------------------------------------------
# Graph-tensor construction (hoisted: computed once, outside the forward path)
# ----------------------------------------------------------------------------
def build_graph_tensors(edge_index, batch, num_nodes, num_graphs):
    # GCN normalization:  A_norm = D^-1/2 (A + I) D^-1/2   (dense)
    a = jnp.zeros((num_nodes, num_nodes), jnp.float32)
    a = a.at[edge_index[0], edge_index[1]].set(1.0)
    a_hat = a + jnp.eye(num_nodes, dtype=jnp.float32)
    deg = jnp.sum(a_hat, axis=1)
    d_inv_sqrt = jax.lax.rsqrt(deg)
    a_norm = d_inv_sqrt[:, None] * a_hat * d_inv_sqrt[None, :]

    # Row-normalized one-hot batch mask (mean = mgn @ x) + transposed binary
    # membership (max pool mask, node axis on sublanes inside the kernel).
    mask_gn = (jnp.arange(num_graphs)[:, None] == batch[None, :]).astype(jnp.float32)
    cnt = jnp.sum(mask_gn, axis=1, keepdims=True)
    inv = jnp.where(cnt > 0, 1.0 / cnt, 0.0)           # empty-graph guard
    mgn_norm = mask_gn * inv
    mem_nt = mask_gn.T                                  # (N, G) binary
    return a_norm, mgn_norm, mem_nt


# ----------------------------------------------------------------------------
# Parameters: init + packing into a few contiguous VMEM-resident buffers
# ----------------------------------------------------------------------------
def init_params(key, num_features, nhid, num_layers, num_classes):
    def dense(key, fan_in, fan_out):
        kw, kb = jax.random.split(key)
        w = jax.random.normal(kw, (fan_in, fan_out), jnp.float32) / jnp.sqrt(float(fan_in))
        b = 0.01 * jax.random.normal(kb, (fan_out,), jnp.float32)
        return w, b

    keys = jax.random.split(key, num_layers + 3)
    convs = [dense(keys[0], num_features, nhid)]
    for i in range(1, num_layers):
        convs.append(dense(keys[i], nhid, nhid))
    lin1 = dense(keys[num_layers], nhid * 2, nhid)
    lin2 = dense(keys[num_layers + 1], nhid, nhid // 2)
    lin3 = dense(keys[num_layers + 2], nhid // 2, num_classes)
    return convs, (lin1, lin2, lin3)


def pack_params(params, num_features, nhid, num_classes, c_pad=C_PAD):
    convs, ((w1, b1), (w2, b2), (w3, b3)) = params
    L, H = len(convs), nhid
    assert num_features <= nhid
    assert c_pad >= nhid and c_pad >= num_classes

    # conv stack: layer-0 weight zero-padded from (F, H) to (H, H)
    conv_w = jnp.zeros((L, H, H), jnp.float32)
    conv_b = jnp.zeros((L, H), jnp.float32)
    for l, (w, b) in enumerate(convs):
        conv_w = conv_w.at[l, :w.shape[0], :w.shape[1]].set(w)
        conv_b = conv_b.at[l, :b.shape[0]].set(b)

    # head slab: rows [0,2H)=lin1, [2H,2H+c_pad)=lin2, [2H+c_pad,2H+2c_pad)=lin3;
    # all zero-padded to c_pad lanes so every head matmul is lane-dense.
    head_w = jnp.zeros((2 * H + 2 * c_pad, c_pad), jnp.float32)
    head_w = head_w.at[0:2 * H, 0:w1.shape[1]].set(w1)
    head_w = head_w.at[2 * H:2 * H + w2.shape[0], 0:w2.shape[1]].set(w2)
    head_w = head_w.at[2 * H + c_pad:2 * H + c_pad + w3.shape[0],
                       0:w3.shape[1]].set(w3)

    head_b = jnp.zeros((3, c_pad), jnp.float32)
    head_b = head_b.at[0, :b1.shape[0]].set(b1)
    head_b = head_b.at[1, :b2.shape[0]].set(b2)
    head_b = head_b.at[2, :].set(_NEG)                  # pad classes -> -1e30 logit
    head_b = head_b.at[2, :b3.shape[0]].set(b3)
    return conv_w, conv_b, head_w, head_b


# ----------------------------------------------------------------------------
# Pure-JAX reference (same math, unpacked params) for a correctness cross-check
# ----------------------------------------------------------------------------
def reference_forward(x, a_norm, mgn_norm, params):
    conv_params, ((w1, b1), (w2, b2), (w3, b3)) = params
    member = mgn_norm > 0.0
    x_out = 0.0
    for w, b in conv_params:
        x = jax.nn.relu(a_norm @ x @ w + b)
        mean = mgn_norm @ x
        mx = jnp.max(jnp.where(member[:, :, None], x[None, :, :], -jnp.inf), axis=1)
        x_out = x_out + jax.nn.relu(jnp.concatenate([mx, mean], axis=1))
    h = jax.nn.relu(x_out @ w1 + b1)
    h = jax.nn.relu(h @ w2 + b2)
    return jax.nn.log_softmax(h @ w3 + b3, axis=-1)


# ----------------------------------------------------------------------------
if __name__ == "__main__":
    NUM_FEATURES = 8
    NHID = 32
    NUM_LAYERS = 3
    NUM_CLASSES = 4
    NODES_PER_GRAPH = 8
    NUM_GRAPHS = 2
    NUM_BATCHES = 4                      # graph-batches per pallas_call (grid axis)
    N = NODES_PER_GRAPH * NUM_GRAPHS     # 16 nodes per graph-batch

    key = jax.random.PRNGKey(0)
    k_x, k_params = jax.random.split(key)

    # node features: one independent graph-batch per grid step
    x = jax.random.normal(k_x, (NUM_BATCHES, N, NUM_FEATURES), jnp.float32)

    # two ring graphs of 8 nodes each (both edge directions), deterministic
    src, dst = [], []
    for g in range(NUM_GRAPHS):
        base = g * NODES_PER_GRAPH
        for i in range(NODES_PER_GRAPH):
            u, v = base + i, base + (i + 1) % NODES_PER_GRAPH
            src += [u, v]
            dst += [v, u]
    edge_index = jnp.array([src, dst], dtype=jnp.int32)                            # (2, 32)
    batch = jnp.repeat(jnp.arange(NUM_GRAPHS, dtype=jnp.int32), NODES_PER_GRAPH)   # (16,)

    params = init_params(k_params, NUM_FEATURES, NHID, NUM_LAYERS, NUM_CLASSES)
    packed = pack_params(params, NUM_FEATURES, NHID, NUM_CLASSES, c_pad=C_PAD)

    # graph tensors built once (hoisted), replicated over the batch grid axis
    a1, mgn1, memnt1 = build_graph_tensors(edge_index, batch, N, NUM_GRAPHS)
    a_norm = jnp.tile(a1[None], (NUM_BATCHES, 1, 1))
    mgn = jnp.tile(mgn1[None], (NUM_BATCHES, 1, 1))
    mem_nt = jnp.tile(memnt1[None], (NUM_BATCHES, 1, 1))

    # pad node features F -> NHID (zero cols; conv1 weight rows padded to match)
    x_pad = jnp.pad(x, ((0, 0), (0, 0), (0, NHID - NUM_FEATURES)))

    fwd = jax.jit(functools.partial(
        model_forward, num_layers=NUM_LAYERS, nhid=NHID, num_classes=NUM_CLASSES))

    out = fwd(a_norm, x_pad, mgn, mem_nt, packed)
    out = jax.block_until_ready(out)

    assert out.shape == (NUM_BATCHES, NUM_GRAPHS, NUM_CLASSES)
    assert bool(jnp.all(jnp.isfinite(out)))
    # log_softmax rows must normalize to ~1
    assert jnp.allclose(jnp.sum(jnp.exp(out), axis=-1), 1.0, atol=1e-4)
    # cross-check every graph-batch against the pure-JAX reference
    ref = jnp.stack([reference_forward(x[b], a1, mgn1, params)
                     for b in range(NUM_BATCHES)])
    assert jnp.allclose(out, ref, atol=1e-4, rtol=1e-4)
    print("KERNEL_OK")
</pallas_src>

<mosaic_0001>
module attributes {stable_mosaic.version = 11 : i64} {
  func.func @kernel(%arg0: i32, %arg1: memref<1x16x16xf32, #tpu.memory_space<vmem>>, %arg2: memref<1x16x32xf32, #tpu.memory_space<vmem>>, %arg3: memref<1x2x16xf32, #tpu.memory_space<vmem>>, %arg4: memref<1x16x2xf32, #tpu.memory_space<vmem>>, %arg5: memref<3x32x32xf32, #tpu.memory_space<vmem>>, %arg6: memref<3x32xf32, #tpu.memory_space<vmem>>, %arg7: memref<320x128xf32, #tpu.memory_space<vmem>>, %arg8: memref<3x128xf32, #tpu.memory_space<vmem>>, %arg9: memref<1x2x128xf32, #tpu.memory_space<vmem>>) attributes {dimension_semantics = [#tpu.dimension_semantics<parallel>], iteration_bounds = array<i64: 4>, scalar_prefetch = 0 : i64, scratch_operands = 0 : i64, tpu.core_type = #tpu.core_type<tc>, window_params = [{transform_indices = @transform_0, window_bounds = array<i64: 1, 16, 16>}, {transform_indices = @transform_1, window_bounds = array<i64: 1, 16, 32>}, {transform_indices = @transform_2, window_bounds = array<i64: 1, 2, 16>}, {transform_indices = @transform_3, window_bounds = array<i64: 1, 16, 2>}, {pipeline_mode = #tpu.pipeline_mode<synchronous>, transform_indices = @transform_4, window_bounds = array<i64: 3, 32, 32>}, {pipeline_mode = #tpu.pipeline_mode<synchronous>, transform_indices = @transform_5, window_bounds = array<i64: 3, 32>}, {pipeline_mode = #tpu.pipeline_mode<synchronous>, transform_indices = @transform_6, window_bounds = array<i64: 320, 128>}, {pipeline_mode = #tpu.pipeline_mode<synchronous>, transform_indices = @transform_7, window_bounds = array<i64: 3, 128>}, {transform_indices = @transform_8, window_bounds = array<i64: 1, 2, 128>}]} {
    %c0 = arith.constant 0 : index
    %c0_0 = arith.constant 0 : index
    %c0_1 = arith.constant 0 : index
    %0 = vector.load %arg1[%c0, %c0_0, %c0_1] : memref<1x16x16xf32, #tpu.memory_space<vmem>>, vector<1x16x16xf32>
    %1 = vector.shape_cast %0 : vector<1x16x16xf32> to vector<16x16xf32>
    %c0_2 = arith.constant 0 : index
    %c0_3 = arith.constant 0 : index
    %c0_4 = arith.constant 0 : index
    %2 = vector.load %arg2[%c0_2, %c0_3, %c0_4] : memref<1x16x32xf32, #tpu.memory_space<vmem>>, vector<1x16x32xf32>
    %3 = vector.shape_cast %2 : vector<1x16x32xf32> to vector<16x32xf32>
    %c0_5 = arith.constant 0 : index
    %c0_6 = arith.constant 0 : index
    %c0_7 = arith.constant 0 : index
    %4 = vector.load %arg3[%c0_5, %c0_6, %c0_7] : memref<1x2x16xf32, #tpu.memory_space<vmem>>, vector<1x2x16xf32>
    %5 = vector.shape_cast %4 : vector<1x2x16xf32> to vector<2x16xf32>
    %c0_8 = arith.constant 0 : index
    %c0_9 = arith.constant 0 : index
    %c0_10 = arith.constant 0 : index
    %6 = vector.load %arg4[%c0_8, %c0_9, %c0_10] : memref<1x16x2xf32, #tpu.memory_space<vmem>>, vector<1x16x2xf32>
    %7 = vector.shape_cast %6 : vector<1x16x2xf32> to vector<16x2xf32>
    %c0_11 = arith.constant 0 : index
    %c0_12 = arith.constant 0 : index
    %8 = vector.load %arg6[%c0_11, %c0_12] : memref<3x32xf32, #tpu.memory_space<vmem>>, vector<3x32xf32>
    %c0_13 = arith.constant 0 : index
    %c0_14 = arith.constant 0 : index
    %9 = vector.load %arg7[%c0_13, %c0_14] : memref<320x128xf32, #tpu.memory_space<vmem>>, vector<320x128xf32>
    %c0_15 = arith.constant 0 : index
    %c0_16 = arith.constant 0 : index
    %10 = vector.load %arg8[%c0_15, %c0_16] : memref<3x128xf32, #tpu.memory_space<vmem>>, vector<3x128xf32>
    %cst = arith.constant 0.000000e+00 : f32
    %11 = vector.broadcast %cst : f32 to vector<2x32xf32>
    %cst_17 = arith.constant 0.000000e+00 : f32
    %12 = vector.broadcast %cst_17 : f32 to vector<2x32xf32>
    %c0_18 = arith.constant 0 : index
    %c0_19 = arith.constant 0 : index
    %c0_20 = arith.constant 0 : index
    %13 = vector.load %arg5[%c0_18, %c0_19, %c0_20] : memref<3x32x32xf32, #tpu.memory_space<vmem>>, vector<1x32x32xf32>
    %14 = vector.shape_cast %13 : vector<1x32x32xf32> to vector<32x32xf32>
    %cst_21 = arith.constant dense<0.000000e+00> : vector<16x32xf32>
    %15 = tpu.matmul %3, %14, %cst_21 {dimension_numbers = #tpu.dot_dimension_numbers<[1], [0], [0], [1], [0, 0, 1, 1], [], []>} : vector<16x32xf32>, vector<32x32xf32>, vector<16x32xf32> -> vector<16x32xf32>
    %cst_22 = arith.constant dense<0.000000e+00> : vector<16x32xf32>
    %16 = tpu.matmul %1, %15, %cst_22 {dimension_numbers = #tpu.dot_dimension_numbers<[1], [0], [0], [1], [0, 0, 1, 1], [], []>} : vector<16x16xf32>, vector<16x32xf32>, vector<16x32xf32> -> vector<16x32xf32>
    %17 = vector.extract_strided_slice %8 {offsets = [0, 0], sizes = [1, 32], strides = [1, 1]} : vector<3x32xf32> to vector<1x32xf32>
    %18 = vector.broadcast %17 : vector<1x32xf32> to vector<16x32xf32>
    %19 = arith.addf %16, %18 : vector<16x32xf32>
    %cst_23 = arith.constant 0.000000e+00 : f32
    %20 = vector.broadcast %cst_23 : f32 to vector<16x32xf32>
    %21 = arith.maximumf %19, %20 : vector<16x32xf32>
    %cst_24 = arith.constant dense<0.000000e+00> : vector<2x32xf32>
    %22 = tpu.matmul %5, %21, %cst_24 {dimension_numbers = #tpu.dot_dimension_numbers<[1], [0], [0], [1], [0, 0, 1, 1], [], []>} : vector<2x16xf32>, vector<16x32xf32>, vector<2x32xf32> -> vector<2x32xf32>
    %23 = vector.extract_strided_slice %7 {offsets = [0, 0], sizes = [16, 1], strides = [1, 1]} : vector<16x2xf32> to vector<16x1xf32>
    %24 = vector.broadcast %23 : vector<16x1xf32> to vector<16x32xf32>
    %25 = arith.mulf %21, %24 : vector<16x32xf32>
    %cst_25 = arith.constant dense<0xFF800000> : vector<32xf32>
    %26 = vector.multi_reduction <maximumf>, %25, %cst_25 [0] : vector<16x32xf32> to vector<32xf32>
    %27 = vector.shape_cast %26 : vector<32xf32> to vector<1x32xf32>
    %28 = vector.extract_strided_slice %7 {offsets = [0, 1], sizes = [16, 1], strides = [1, 1]} : vector<16x2xf32> to vector<16x1xf32>
    %29 = vector.broadcast %28 : vector<16x1xf32> to vector<16x32xf32>
    %30 = arith.mulf %21, %29 : vector<16x32xf32>
    %cst_26 = arith.constant dense<0xFF800000> : vector<32xf32>
    %31 = vector.multi_reduction <maximumf>, %30, %cst_26 [0] : vector<16x32xf32> to vector<32xf32>
    %32 = vector.shape_cast %31 : vector<32xf32> to vector<1x32xf32>
    %33 = tpu.concatenate %27, %32 in 0 : vector<1x32xf32>, vector<1x32xf32> -> vector<2x32xf32>
    %cst_27 = arith.constant 0.000000e+00 : f32
    %34 = vector.broadcast %cst_27 : f32 to vector<2x32xf32>
    %35 = arith.maximumf %33, %34 : vector<2x32xf32>
    %36 = arith.addf %11, %35 : vector<2x32xf32>
    %cst_28 = arith.constant 0.000000e+00 : f32
    %37 = vector.broadcast %cst_28 : f32 to vector<2x32xf32>
    %38 = arith.maximumf %22, %37 : vector<2x32xf32>
    %39 = arith.addf %12, %38 : vector<2x32xf32>
    %c1 = arith.constant 1 : index
    %c0_29 = arith.constant 0 : index
    %c0_30 = arith.constant 0 : index
    %40 = vector.load %arg5[%c1, %c0_29, %c0_30] : memref<3x32x32xf32, #tpu.memory_space<vmem>>, vector<1x32x32xf32>
    %41 = vector.shape_cast %40 : vector<1x32x32xf32> to vector<32x32xf32>
    %cst_31 = arith.constant dense<0.000000e+00> : vector<16x32xf32>
    %42 = tpu.matmul %21, %41, %cst_31 {dimension_numbers = #tpu.dot_dimension_numbers<[1], [0], [0], [1], [0, 0, 1, 1], [], []>} : vector<16x32xf32>, vector<32x32xf32>, vector<16x32xf32> -> vector<16x32xf32>
    %cst_32 = arith.constant dense<0.000000e+00> : vector<16x32xf32>
    %43 = tpu.matmul %1, %42, %cst_32 {dimension_numbers = #tpu.dot_dimension_numbers<[1], [0], [0], [1], [0, 0, 1, 1], [], []>} : vector<16x16xf32>, vector<16x32xf32>, vector<16x32xf32> -> vector<16x32xf32>
    %44 = vector.extract_strided_slice %8 {offsets = [1, 0], sizes = [1, 32], strides = [1, 1]} : vector<3x32xf32> to vector<1x32xf32>
    %45 = vector.broadcast %44 : vector<1x32xf32> to vector<16x32xf32>
    %46 = arith.addf %43, %45 : vector<16x32xf32>
    %cst_33 = arith.constant 0.000000e+00 : f32
    %47 = vector.broadcast %cst_33 : f32 to vector<16x32xf32>
    %48 = arith.maximumf %46, %47 : vector<16x32xf32>
    %cst_34 = arith.constant dense<0.000000e+00> : vector<2x32xf32>
    %49 = tpu.matmul %5, %48, %cst_34 {dimension_numbers = #tpu.dot_dimension_numbers<[1], [0], [0], [1], [0, 0, 1, 1], [], []>} : vector<2x16xf32>, vector<16x32xf32>, vector<2x32xf32> -> vector<2x32xf32>
    %50 = vector.extract_strided_slice %7 {offsets = [0, 0], sizes = [16, 1], strides = [1, 1]} : vector<16x2xf32> to vector<16x1xf32>
    %51 = vector.broadcast %50 : vector<16x1xf32> to vector<16x32xf32>
    %52 = arith.mulf %48, %51 : vector<16x32xf32>
    %cst_35 = arith.constant dense<0xFF800000> : vector<32xf32>
    %53 = vector.multi_reduction <maximumf>, %52, %cst_35 [0] : vector<16x32xf32> to vector<32xf32>
    %54 = vector.shape_cast %53 : vector<32xf32> to vector<1x32xf32>
    %55 = vector.extract_strided_slice %7 {offsets = [0, 1], sizes = [16, 1], strides = [1, 1]} : vector<16x2xf32> to vector<16x1xf32>
    %56 = vector.broadcast %55 : vector<16x1xf32> to vector<16x32xf32>
    %57 = arith.mulf %48, %56 : vector<16x32xf32>
    %cst_36 = arith.constant dense<0xFF800000> : vector<32xf32>
    %58 = vector.multi_reduction <maximumf>, %57, %cst_36 [0] : vector<16x32xf32> to vector<32xf32>
    %59 = vector.shape_cast %58 : vector<32xf32> to vector<1x32xf32>
    %60 = tpu.concatenate %54, %59 in 0 : vector<1x32xf32>, vector<1x32xf32> -> vector<2x32xf32>
    %cst_37 = arith.constant 0.000000e+00 : f32
    %61 = vector.broadcast %cst_37 : f32 to vector<2x32xf32>
    %62 = arith.maximumf %60, %61 : vector<2x32xf32>
    %63 = arith.addf %36, %62 : vector<2x32xf32>
    %cst_38 = arith.constant 0.000000e+00 : f32
    %64 = vector.broadcast %cst_38 : f32 to vector<2x32xf32>
    %65 = arith.maximumf %49, %64 : vector<2x32xf32>
    %66 = arith.addf %39, %65 : vector<2x32xf32>
    %c2 = arith.constant 2 : index
    %c0_39 = arith.constant 0 : index
    %c0_40 = arith.constant 0 : index
    %67 = vector.load %arg5[%c2, %c0_39, %c0_40] : memref<3x32x32xf32, #tpu.memory_space<vmem>>, vector<1x32x32xf32>
    %68 = vector.shape_cast %67 : vector<1x32x32xf32> to vector<32x32xf32>
    %cst_41 = arith.constant dense<0.000000e+00> : vector<16x32xf32>
    %69 = tpu.matmul %48, %68, %cst_41 {dimension_numbers = #tpu.dot_dimension_numbers<[1], [0], [0], [1], [0, 0, 1, 1], [], []>} : vector<16x32xf32>, vector<32x32xf32>, vector<16x32xf32> -> vector<16x32xf32>
    %cst_42 = arith.constant dense<0.000000e+00> : vector<16x32xf32>
    %70 = tpu.matmul %1, %69, %cst_42 {dimension_numbers = #tpu.dot_dimension_numbers<[1], [0], [0], [1], [0, 0, 1, 1], [], []>} : vector<16x16xf32>, vector<16x32xf32>, vector<16x32xf32> -> vector<16x32xf32>
    %71 = vector.extract_strided_slice %8 {offsets = [2, 0], sizes = [1, 32], strides = [1, 1]} : vector<3x32xf32> to vector<1x32xf32>
    %72 = vector.broadcast %71 : vector<1x32xf32> to vector<16x32xf32>
    %73 = arith.addf %70, %72 : vector<16x32xf32>
    %cst_43 = arith.constant 0.000000e+00 : f32
    %74 = vector.broadcast %cst_43 : f32 to vector<16x32xf32>
    %75 = arith.maximumf %73, %74 : vector<16x32xf32>
    %cst_44 = arith.constant dense<0.000000e+00> : vector<2x32xf32>
    %76 = tpu.matmul %5, %75, %cst_44 {dimension_numbers = #tpu.dot_dimension_numbers<[1], [0], [0], [1], [0, 0, 1, 1], [], []>} : vector<2x16xf32>, vector<16x32xf32>, vector<2x32xf32> -> vector<2x32xf32>
    %77 = vector.extract_strided_slice %7 {offsets = [0, 0], sizes = [16, 1], strides = [1, 1]} : vector<16x2xf32> to vector<16x1xf32>
    %78 = vector.broadcast %77 : vector<16x1xf32> to vector<16x32xf32>
    %79 = arith.mulf %75, %78 : vector<16x32xf32>
    %cst_45 = arith.constant dense<0xFF800000> : vector<32xf32>
    %80 = vector.multi_reduction <maximumf>, %79, %cst_45 [0] : vector<16x32xf32> to vector<32xf32>
    %81 = vector.shape_cast %80 : vector<32xf32> to vector<1x32xf32>
    %82 = vector.extract_strided_slice %7 {offsets = [0, 1], sizes = [16, 1], strides = [1, 1]} : vector<16x2xf32> to vector<16x1xf32>
    %83 = vector.broadcast %82 : vector<16x1xf32> to vector<16x32xf32>
    %84 = arith.mulf %75, %83 : vector<16x32xf32>
    %cst_46 = arith.constant dense<0xFF800000> : vector<32xf32>
    %85 = vector.multi_reduction <maximumf>, %84, %cst_46 [0] : vector<16x32xf32> to vector<32xf32>
    %86 = vector.shape_cast %85 : vector<32xf32> to vector<1x32xf32>
    %87 = tpu.concatenate %81, %86 in 0 : vector<1x32xf32>, vector<1x32xf32> -> vector<2x32xf32>
    %cst_47 = arith.constant 0.000000e+00 : f32
    %88 = vector.broadcast %cst_47 : f32 to vector<2x32xf32>
    %89 = arith.maximumf %87, %88 : vector<2x32xf32>
    %90 = arith.addf %63, %89 : vector<2x32xf32>
    %cst_48 = arith.constant 0.000000e+00 : f32
    %91 = vector.broadcast %cst_48 : f32 to vector<2x32xf32>
    %92 = arith.maximumf %76, %91 : vector<2x32xf32>
    %93 = arith.addf %66, %92 : vector<2x32xf32>
    %94 = vector.extract_strided_slice %9 {offsets = [0, 0], sizes = [32, 128], strides = [1, 1]} : vector<320x128xf32> to vector<32x128xf32>
    %95 = vector.extract_strided_slice %9 {offsets = [32, 0], sizes = [32, 128], strides = [1, 1]} : vector<320x128xf32> to vector<32x128xf32>
    %96 = vector.extract_strided_slice %9 {offsets = [64, 0], sizes = [128, 128], strides = [1, 1]} : vector<320x128xf32> to vector<128x128xf32>
    %97 = vector.extract_strided_slice %9 {offsets = [192, 0], sizes = [128, 128], strides = [1, 1]} : vector<320x128xf32> to vector<128x128xf32>
    %cst_49 = arith.constant dense<0.000000e+00> : vector<2x128xf32>
    %98 = tpu.matmul %90, %94, %cst_49 {dimension_numbers = #tpu.dot_dimension_numbers<[1], [0], [0], [1], [0, 0, 1, 1], [], []>} : vector<2x32xf32>, vector<32x128xf32>, vector<2x128xf32> -> vector<2x128xf32>
    %cst_50 = arith.constant dense<0.000000e+00> : vector<2x128xf32>
    %99 = tpu.matmul %93, %95, %cst_50 {dimension_numbers = #tpu.dot_dimension_numbers<[1], [0], [0], [1], [0, 0, 1, 1], [], []>} : vector<2x32xf32>, vector<32x128xf32>, vector<2x128xf32> -> vector<2x128xf32>
    %100 = arith.addf %98, %99 : vector<2x128xf32>
    %101 = vector.extract_strided_slice %10 {offsets = [0, 0], sizes = [1, 128], strides = [1, 1]} : vector<3x128xf32> to vector<1x128xf32>
    %102 = vector.broadcast %101 : vector<1x128xf32> to vector<2x128xf32>
    %103 = arith.addf %100, %102 : vector<2x128xf32>
    %cst_51 = arith.constant 0.000000e+00 : f32
    %104 = vector.broadcast %cst_51 : f32 to vector<2x128xf32>
    %105 = arith.maximumf %103, %104 : vector<2x128xf32>
    %cst_52 = arith.constant dense<0.000000e+00> : vector<2x128xf32>
    %106 = tpu.matmul %105, %96, %cst_52 {dimension_numbers = #tpu.dot_dimension_numbers<[1], [0], [0], [1], [0, 0, 1, 1], [], []>} : vector<2x128xf32>, vector<128x128xf32>, vector<2x128xf32> -> vector<2x128xf32>
    %107 = vector.extract_strided_slice %10 {offsets = [1, 0], sizes = [1, 128], strides = [1, 1]} : vector<3x128xf32> to vector<1x128xf32>
    %108 = vector.broadcast %107 : vector<1x128xf32> to vector<2x128xf32>
    %109 = arith.addf %106, %108 : vector<2x128xf32>
    %cst_53 = arith.constant 0.000000e+00 : f32
    %110 = vector.broadcast %cst_53 : f32 to vector<2x128xf32>
    %111 = arith.maximumf %109, %110 : vector<2x128xf32>
    %cst_54 = arith.constant dense<0.000000e+00> : vector<2x128xf32>
    %112 = tpu.matmul %111, %97, %cst_54 {dimension_numbers = #tpu.dot_dimension_numbers<[1], [0], [0], [1], [0, 0, 1, 1], [], []>} : vector<2x128xf32>, vector<128x128xf32>, vector<2x128xf32> -> vector<2x128xf32>
    %113 = vector.extract_strided_slice %10 {offsets = [2, 0], sizes = [1, 128], strides = [1, 1]} : vector<3x128xf32> to vector<1x128xf32>
    %114 = vector.broadcast %113 : vector<1x128xf32> to vector<2x128xf32>
    %115 = arith.addf %112, %114 : vector<2x128xf32>
    %cst_55 = arith.constant dense<0xFF800000> : vector<2xf32>
    %116 = vector.multi_reduction <maximumf>, %115, %cst_55 [1] : vector<2x128xf32> to vector<2xf32>
    %117 = vector.shape_cast %116 : vector<2xf32> to vector<2x1xf32>
    %118 = vector.broadcast %117 : vector<2x1xf32> to vector<2x128xf32>
    %119 = arith.subf %115, %118 : vector<2x128xf32>
    %120 = math.exp %119 : vector<2x128xf32>
    %cst_56 = arith.constant dense<0.000000e+00> : vector<2xf32>
    %121 = vector.multi_reduction <add>, %120, %cst_56 [1] : vector<2x128xf32> to vector<2xf32>
    %122 = vector.shape_cast %121 : vector<2xf32> to vector<2x1xf32>
    %123 = math.log %122 : vector<2x1xf32>
    %124 = arith.addf %117, %123 : vector<2x1xf32>
    %125 = vector.broadcast %124 : vector<2x1xf32> to vector<2x128xf32>
    %126 = arith.subf %115, %125 : vector<2x128xf32>
    %c0_57 = arith.constant 0 : index
    %c0_58 = arith.constant 0 : index
    %c0_59 = arith.constant 0 : index
    %127 = vector.load %arg9[%c0_57, %c0_58, %c0_59] : memref<1x2x128xf32, #tpu.memory_space<vmem>>, vector<1x2x128xf32>
    %128 = vector.shape_cast %127 : vector<1x2x128xf32> to vector<2x128xf32>
    %129 = vector.shape_cast %126 : vector<2x128xf32> to vector<1x2x128xf32>
    tpu.vector_store %arg9[%c0_57, %c0_58, %c0_59], %129 {strides = array<i32>} : memref<1x2x128xf32, #tpu.memory_space<vmem>>, vector<1x2x128xf32>,
    return
  }
  func.func @transform_0(%arg0: i32) -> (i32, i32, i32) {
    %c0_i32 = arith.constant 0 : i32
    %c0_i32_0 = arith.constant 0 : i32
    %c0_i32_1 = arith.constant 0 : i32
    return %arg0, %c0_i32, %c0_i32_0 : i32, i32, i32
  }
  func.func @transform_1(%arg0: i32) -> (i32, i32, i32) {
    %c0_i32 = arith.constant 0 : i32
    %c0_i32_0 = arith.constant 0 : i32
    %c0_i32_1 = arith.constant 0 : i32
    return %arg0, %c0_i32, %c0_i32_0 : i32, i32, i32
  }
  func.func @transform_2(%arg0: i32) -> (i32, i32, i32) {
    %c0_i32 = arith.constant 0 : i32
    %c0_i32_0 = arith.constant 0 : i32
    %c0_i32_1 = arith.constant 0 : i32
    return %arg0, %c0_i32, %c0_i32_0 : i32, i32, i32
  }
  func.func @transform_3(%arg0: i32) -> (i32, i32, i32) {
    %c0_i32 = arith.constant 0 : i32
    %c0_i32_0 = arith.constant 0 : i32
    %c0_i32_1 = arith.constant 0 : i32
    return %arg0, %c0_i32, %c0_i32_0 : i32, i32, i32
  }
  func.func @transform_4(%arg0: i32) -> (i32, i32, i32) {
    %c0_i32 = arith.constant 0 : i32
    %c0_i32_0 = arith.constant 0 : i32
    %c0_i32_1 = arith.constant 0 : i32
    %c0_i32_2 = arith.constant 0 : i32
    return %c0_i32, %c0_i32_0, %c0_i32_1 : i32, i32, i32
  }
  func.func @transform_5(%arg0: i32) -> (i32, i32) {
    %c0_i32 = arith.constant 0 : i32
    %c0_i32_0 = arith.constant 0 : i32
    %c0_i32_1 = arith.constant 0 : i32
    return %c0_i32, %c0_i32_0 : i32, i32
  }
  func.func @transform_6(%arg0: i32) -> (i32, i32) {
    %c0_i32 = arith.constant 0 : i32
    %c0_i32_0 = arith.constant 0 : i32
    %c0_i32_1 = arith.constant 0 : i32
    return %c0_i32, %c0_i32_0 : i32, i32
  }
  func.func @transform_7(%arg0: i32) -> (i32, i32) {
    %c0_i32 = arith.constant 0 : i32
    %c0_i32_0 = arith.constant 0 : i32
    %c0_i32_1 = arith.constant 0 : i32
    return %c0_i32, %c0_i32_0 : i32, i32
  }
  func.func @transform_8(%arg0: i32) -> (i32, i32, i32) {
    %c0_i32 = arith.constant 0 : i32
    %c0_i32_0 = arith.constant 0 : i32
    %c0_i32_1 = arith.constant 0 : i32
    return %arg0, %c0_i32, %c0_i32_0 : i32, i32, i32
  }
}

</mosaic_0001>

<llo_original>
// kernel: model_forward.1
$region0: #{model_forward.1}
  #allocation0 [shape = 'u32[]', space=smem, size = 0x4, offset = 0x4, fixed_abs, tag = 'smem constant byte address 0x4 - core index']
  #allocation1 [shape = 'u32[144,128]{1,0:T(1,128)}', space=vmem, size = 0x12000, scoped, tag = 'internal scratch']
  %s0 = inlined_call_operand.vmem [shape: f32[4,16,16], index: 0, kind: input, shape index: {}]
  %s1 = inlined_call_operand.hbm [shape: f32[4,16,32], index: 1, kind: input, shape index: {}]
  %s2 = inlined_call_operand.vmem [shape: f32[4,2,16], index: 2, kind: input, shape index: {}]
  %s3 = inlined_call_operand.vmem [shape: f32[4,16,2], index: 3, kind: input, shape index: {}]
  %s4 = inlined_call_operand.hbm [shape: f32[3,32,32], index: 4, kind: input, shape index: {}]
  %s5 = inlined_call_operand.vmem [shape: f32[3,32], index: 5, kind: input, shape index: {}]
  %s6 = inlined_call_operand.hbm [shape: f32[320,128], index: 6, kind: input, shape index: {}]
  %s7 = inlined_call_operand.vmem [shape: f32[3,128], index: 7, kind: input, shape index: {}]
  %s8 = inlined_call_operand.hbm [shape: f32[4,2,128], index: 8, kind: output, shape index: {}]
  %s9 = sld [smem:[#allocation0]]
  $region77: #{model_forward.1} parent=0
    _
  %s11 = ssub.s32 1, %s9
  %s12 = scalar_select 0, %s11, %s9
  $region1: #{model_forward.1} parent=0
    #allocation2 [shape = 'u8[16384]{0}', space=vmem, size = 0x4000, scoped, tag = 'input window, operand 1']
    #allocation3 [shape = 's32[2]{0}', space=sflag, size = 0x8, scoped, tag = 'scoped memory for model_forward.1']
    #allocation4 [shape = 's32[2]{0}', space=sflag, size = 0x8, scoped, tag = 'scoped memory for model_forward.1']
    #allocation5 [shape = 'u8[49152]{0}', space=vmem, size = 0xc000, scoped, tag = 'input window, operand 4, single buffered']
    #allocation6 [shape = 's32[1]{0}', space=sflag, size = 0x4, scoped, tag = 'scoped memory for model_forward.1']
    #allocation7 [shape = 'u8[163840]{0}', space=vmem, size = 0x28000, scoped, tag = 'input window, operand 6, single buffered']
    #allocation8 [shape = 'u8[2048]{0}', space=vmem, size = 0x800, scoped, tag = 'output window, operand 0']
    %13 = vsyncpa [#allocation3], 0
    %s14 = scalar_lea.sflag [#allocation3], 1
    %15 = vsyncpa %s14, 0
    %16 = vsyncpa [#allocation6], 0
    %17 = vsyncpa [#allocation4], 0
    %s18 = scalar_lea.sflag [#allocation4], 1
    %19 = vsyncpa %s18, 0
    loop: start=0, step=1, limit=6
    $region2: #{model_forward.1} parent=1 // loop_pre_header
      _
    $region3: #{model_forward.1} parent=1 // loop_header
      %s21 = sphi 0, %s25
      %p22 = scmp.ge.s32.totalorder %s21, 6
      %s31 = sphi 0, %s33
      %s34 = sphi 0, %s31
      %s35 = sphi 0, %s34
      %s51 = sphi 0, %s35
      %s57 = sphi 0, %s59
      %s60 = sphi 0, %s57
      %s61 = sphi 0, %s60
      %s77 = sphi 0, %s61
      %s83 = sphi 0, %s85
      %s86 = sphi 0, %s83
      %s87 = sphi 0, %s86
      %s103 = sphi 0, %s87
      %s109 = sphi 0, %s111
      %s112 = sphi 0, %s109
      %s113 = sphi 0, %s112
      %s129 = sphi 0, %s113
      %s133 = sphi 0, %s133
      %s135 = sphi 0, %s133
      %s136 = sphi 0, %s135
      %s150 = sphi 0, %s136
      %s154 = sphi 0, %s154
      %s156 = sphi 0, %s154
      %s157 = sphi 0, %s156
      %s171 = sphi 0, %s157
      %s175 = sphi 0, %s175
      %s177 = sphi 0, %s175
      %s178 = sphi 0, %s177
      %s192 = sphi 0, %s178
      %s196 = sphi 0, %s196
      %s198 = sphi 0, %s196
      %s199 = sphi 0, %s198
      %s213 = sphi 0, %s199
      %s219 = sphi 0, %s221
      %s222 = sphi 0, %s219
      %s223 = sphi 0, %s222
      %s239 = sphi 0, %s223
    $region4: #{model_forward.1} parent=1 // loop_header_branch
      %24 = sbr.rel (%p22) target = $region8
    $region5: #{model_forward.1} parent=1 // loop_body
      %s26 = ssub.s32 %s21, 1
      %s27 = ssub.s32 %s21, 2
      %s28 = sadd.s32 %s21, 1
      %s29 = ssub.s32 %s21, %s28
      %p30 = scmp.eq.s32.totalorder %s29, 0
      %s32 = sadd.s32 %s31, 1
      %s33 = scalar_select %p30, %s31, %s32
      %p36 = pneg %p30
      %p37 = scmp.eq.s32.totalorder %s21, 3
      %p38 = por %p36, %p37
      %p39 = scmp.ne.s32.totalorder %s31, %s34
      %p40 = scmp.eq.s32.totalorder %s21, 0
      %p41 = por %p39, %p40
      %p42 = scmp.ne.s32.totalorder %s31, %s34
      %p43 = scmp.eq.s32.totalorder %s26, 3
      %p44 = por %p42, %p43
      %p45 = scmp.ne.s32.totalorder %s34, %s35
      %p46 = scmp.eq.s32.totalorder %s26, 0
      %p47 = por %p45, %p46
      %p48 = scmp.ne.s32.totalorder %s34, %s35
      %p49 = scmp.eq.s32.totalorder %s27, 3
      %p50 = por %p48, %p49
      %p52 = scmp.ne.s32.totalorder %s35, %s51
      %p53 = scmp.eq.s32.totalorder %s27, 0
      %p54 = por %p52, %p53
      %s55 = ssub.s32 %s21, %s28
      %p56 = scmp.eq.s32.totalorder %s55, 0
      %s58 = sadd.s32 %s57, 1
      %s59 = scalar_select %p56, %s57, %s58
      %p62 = pneg %p56
      %p63 = scmp.eq.s32.totalorder %s21, 3
      %p64 = por %p62, %p63
      %p65 = scmp.ne.s32.totalorder %s57, %s60
      %p66 = scmp.eq.s32.totalorder %s21, 0
      %p67 = por %p65, %p66
      %p68 = scmp.ne.s32.totalorder %s57, %s60
      %p69 = scmp.eq.s32.totalorder %s26, 3
      %p70 = por %p68, %p69
      %p71 = scmp.ne.s32.totalorder %s60, %s61
      %p72 = scmp.eq.s32.totalorder %s26, 0
      %p73 = por %p71, %p72
      %p74 = scmp.ne.s32.totalorder %s60, %s61
      %p75 = scmp.eq.s32.totalorder %s27, 3
      %p76 = por %p74, %p75
      %p78 = scmp.ne.s32.totalorder %s61, %s77
      %p79 = scmp.eq.s32.totalorder %s27, 0
      %p80 = por %p78, %p79
      %s81 = ssub.s32 %s21, %s28
      %p82 = scmp.eq.s32.totalorder %s81, 0
      %s84 = sadd.s32 %s83, 1
      %s85 = scalar_select %p82, %s83, %s84
      %p88 = pneg %p82
      %p89 = scmp.eq.s32.totalorder %s21, 3
      %p90 = por %p88, %p89
      %p91 = scmp.ne.s32.totalorder %s83, %s86
      %p92 = scmp.eq.s32.totalorder %s21, 0
      %p93 = por %p91, %p92
      %p94 = scmp.ne.s32.totalorder %s83, %s86
      %p95 = scmp.eq.s32.totalorder %s26, 3
      %p96 = por %p94, %p95
      %p97 = scmp.ne.s32.totalorder %s86, %s87
      %p98 = scmp.eq.s32.totalorder %s26, 0
      %p99 = por %p97, %p98
      %p100 = scmp.ne.s32.totalorder %s86, %s87
      %p101 = scmp.eq.s32.totalorder %s27, 3
      %p102 = por %p100, %p101
      %p104 = scmp.ne.s32.totalorder %s87, %s103
      %p105 = scmp.eq.s32.totalorder %s27, 0
      %p106 = por %p104, %p105
      %s107 = ssub.s32 %s21, %s28
      %p108 = scmp.eq.s32.totalorder %s107, 0
      %s110 = sadd.s32 %s109, 1
      %s111 = scalar_select %p108, %s109, %s110
      %p114 = pneg %p108
      %p115 = scmp.eq.s32.totalorder %s21, 3
      %p116 = por %p114, %p115
      %p117 = scmp.ne.s32.totalorder %s109, %s112
      %p118 = scmp.eq.s32.totalorder %s21, 0
      %p119 = por %p117, %p118
      %p120 = scmp.ne.s32.totalorder %s109, %s112
      %p121 = scmp.eq.s32.totalorder %s26, 3
      %p122 = por %p120, %p121
      %p123 = scmp.ne.s32.totalorder %s112, %s113
      %p124 = scmp.eq.s32.totalorder %s26, 0
      %p125 = por %p123, %p124
      %p126 = scmp.ne.s32.totalorder %s112, %s113
      %p127 = scmp.eq.s32.totalorder %s27, 3
      %p128 = por %p126, %p127
      %p130 = scmp.ne.s32.totalorder %s113, %s129
      %p131 = scmp.eq.s32.totalorder %s27, 0
      %p132 = por %p130, %p131
      %s134 = sadd.s32 %s133, 1
      %p137 = scmp.eq.s32.totalorder %s21, 3
      %p138 = scmp.ne.s32.totalorder %s133, %s135
      %p139 = scmp.eq.s32.totalorder %s21, 0
      %p140 = por %p138, %p139
      %p141 = scmp.ne.s32.totalorder %s133, %s135
      %p142 = scmp.eq.s32.totalorder %s26, 3
      %p143 = por %p141, %p142
      %p144 = scmp.ne.s32.totalorder %s135, %s136
      %p145 = scmp.eq.s32.totalorder %s26, 0
      %p146 = por %p144, %p145
      %p147 = scmp.ne.s32.totalorder %s135, %s136
      %p148 = scmp.eq.s32.totalorder %s27, 3
      %p149 = por %p147, %p148
      %p151 = scmp.ne.s32.totalorder %s136, %s150
      %p152 = scmp.eq.s32.totalorder %s27, 0
      %p153 = por %p151, %p152
      %s155 = sadd.s32 %s154, 1
      %p158 = scmp.eq.s32.totalorder %s21, 3
      %p159 = scmp.ne.s32.totalorder %s154, %s156
      %p160 = scmp.eq.s32.totalorder %s21, 0
      %p161 = por %p159, %p160
      %p162 = scmp.ne.s32.totalorder %s154, %s156
      %p163 = scmp.eq.s32.totalorder %s26, 3
      %p164 = por %p162, %p163
      %p165 = scmp.ne.s32.totalorder %s156, %s157
      %p166 = scmp.eq.s32.totalorder %s26, 0
      %p167 = por %p165, %p166
      %p168 = scmp.ne.s32.totalorder %s156, %s157
      %p169 = scmp.eq.s32.totalorder %s27, 3
      %p170 = por %p168, %p169
      %p172 = scmp.ne.s32.totalorder %s157, %s171
      %p173 = scmp.eq.s32.totalorder %s27, 0
      %p174 = por %p172, %p173
      %s176 = sadd.s32 %s175, 1
      %p179 = scmp.eq.s32.totalorder %s21, 3
      %p180 = scmp.ne.s32.totalorder %s175, %s177
      %p181 = scmp.eq.s32.totalorder %s21, 0
      %p182 = por %p180, %p181
      %p183 = scmp.ne.s32.totalorder %s175, %s177
      %p184 = scmp.eq.s32.totalorder %s26, 3
      %p185 = por %p183, %p184
      %p186 = scmp.ne.s32.totalorder %s177, %s178
      %p187 = scmp.eq.s32.totalorder %s26, 0
      %p188 = por %p186, %p187
      %p189 = scmp.ne.s32.totalorder %s177, %s178
      %p190 = scmp.eq.s32.totalorder %s27, 3
      %p191 = por %p189, %p190
      %p193 = scmp.ne.s32.totalorder %s178, %s192
      %p194 = scmp.eq.s32.totalorder %s27, 0
      %p195 = por %p193, %p194
      %s197 = sadd.s32 %s196, 1
      %p200 = scmp.eq.s32.totalorder %s21, 3
      %p201 = scmp.ne.s32.totalorder %s196, %s198
      %p202 = scmp.eq.s32.totalorder %s21, 0
      %p203 = por %p201, %p202
      %p204 = scmp.ne.s32.totalorder %s196, %s198
      %p205 = scmp.eq.s32.totalorder %s26, 3
      %p206 = por %p204, %p205
      %p207 = scmp.ne.s32.totalorder %s198, %s199
      %p208 = scmp.eq.s32.totalorder %s26, 0
      %p209 = por %p207, %p208
      %p210 = scmp.ne.s32.totalorder %s198, %s199
      %p211 = scmp.eq.s32.totalorder %s27, 3
      %p212 = por %p210, %p211
      %p214 = scmp.ne.s32.totalorder %s199, %s213
      %p215 = scmp.eq.s32.totalorder %s27, 0
      %p216 = por %p214, %p215
      %s217 = ssub.s32 %s21, %s28
      %p218 = scmp.eq.s32.totalorder %s217, 0
      %s220 = sadd.s32 %s219, 1
      %s221 = scalar_select %p218, %s219, %s220
      %p224 = pneg %p218
      %p225 = scmp.eq.s32.totalorder %s21, 3
      %p226 = por %p224, %p225
      %p227 = scmp.ne.s32.totalorder %s219, %s222
      %p228 = scmp.eq.s32.totalorder %s21, 0
      %p229 = por %p227, %p228
      %p230 = scmp.ne.s32.totalorder %s219, %s222
      %p231 = scmp.eq.s32.totalorder %s26, 3
      %p232 = por %p230, %p231
      %p233 = scmp.ne.s32.totalorder %s222, %s223
      %p234 = scmp.eq.s32.totalorder %s26, 0
      %p235 = por %p233, %p234
      %p236 = scmp.ne.s32.totalorder %s222, %s223
      %p237 = scmp.eq.s32.totalorder %s27, 3
      %p238 = por %p236, %p237
      %p240 = scmp.ne.s32.totalorder %s223, %s239
      %p241 = scmp.eq.s32.totalorder %s27, 0
      %p242 = por %p240, %p241
      %p243 = scmp.le.s32.totalorder 1, %s21
      %p244 = scmp.lt.s32.totalorder %s21, 5
      %p245 = pnand %p243, %p244
      %p246 = pneg %p245
      // Predicated region
      $region9: #{model_forward.1} parent=5 // pred_check
        _
      $region10: #{model_forward.1} parent=5 // pred_check_branch
        %248 = sbr.rel (%p245) target = $region12
      $region11: #{model_forward.1} parent=5 // pred_region
        %s249 = ssub.s32 %s21, 1
        // Predicated region
        $region13: #{model_forward.1} parent=11 // pred_check
          %p250 = pneg %p146
        $region14: #{model_forward.1} parent=11 // pred_check_branch
          %252 = sbr.rel (%p250) target = $region16
        $region15: #{model_forward.1} parent=11 // pred_region
          %s254 = ssub.s32 1536, 1536
          %255 = vsyncadd [#allocation6], %s254
          %s256 = sshll.u32 [#allocation5], 4
          %s257 = int_to_ptr.vmem [resolvable:$true] %s256
          %262 = dma.hbm_to_vmem [thread:$0]  %s4, 1536, %s257, [#allocation6], 128, 128, 8
        $region16: #{model_forward.1} parent=11 // pred_fallthru
          _
        // Predicated region
        $region17: #{model_forward.1} parent=11 // pred_check
          %p263 = pneg %p167
        $region18: #{model_forward.1} parent=11 // pred_check_branch
          %265 = sbr.rel (%p263) target = $region20
        $region19: #{model_forward.1} parent=11 // pred_region
          _
        $region20: #{model_forward.1} parent=11 // pred_fallthru
          _
        // Predicated region
        $region21: #{model_forward.1} parent=11 // pred_check
          %p266 = pneg %p188
        $region22: #{model_forward.1} parent=11 // pred_check_branch
          %268 = sbr.rel (%p266) target = $region24
        $region23: #{model_forward.1} parent=11 // pred_region
          %s270 = ssub.s32 5120, 5120
          %271 = vsyncadd [#allocation6], %s270
          %s272 = sshll.u32 [#allocation7], 4
          %s273 = int_to_ptr.vmem [resolvable:$true] %s272
          %278 = dma.hbm_to_vmem [thread:$0]  %s6, 5120, %s273, [#allocation6], 128, 128, 8
        $region24: #{model_forward.1} parent=11 // pred_fallthru
          _
        // Predicated region
        $region25: #{model_forward.1} parent=11 // pred_check
          %p279 = pneg %p209
        $region26: #{model_forward.1} parent=11 // pred_check_branch
          %281 = sbr.rel (%p279) target = $region28
        $region27: #{model_forward.1} parent=11 // pred_region
          _
        $region28: #{model_forward.1} parent=11 // pred_fallthru
          _
      $region12: #{model_forward.1} parent=5 // pred_fallthru
        _
      %p282 = scmp.lt.s32.totalorder %s21, 4
      // Predicated region
      $region29: #{model_forward.1} parent=5 // pred_check
        %p283 = pneg %p282
      $region30: #{model_forward.1} parent=5 // pred_check_branch
        %285 = sbr.rel (%p283) target = $region32
      $region31: #{model_forward.1} parent=5 // pred_region
        // Predicated region
        $region33: #{model_forward.1} parent=31 // pred_check
          %p286 = pneg %p41
        $region34: #{model_forward.1} parent=31 // pred_check_branch
          %288 = sbr.rel (%p286) target = $region36
        $region35: #{model_forward.1} parent=31 // pred_region
          %p289 = scmp.lt.s32.totalorder %s21, 3
          %s290 = scalar_select %p289, %s21, 3
          %s291 = smul.addr %s290, 2
          %s292 = smul.addr %s291, 8
          %s293 = scalar_lea.vmem %s0, %s292
        $region36: #{model_forward.1} parent=31 // pred_fallthru
          _
        // Predicated region
        $region37: #{model_forward.1} parent=31 // pred_check
          %p294 = pneg %p67
        $region38: #{model_forward.1} parent=31 // pred_check_branch
          %296 = sbr.rel (%p294) target = $region40
        $region39: #{model_forward.1} parent=31 // pred_region
          %s297 = sand.u32 %s57, 1
          %s298 = scalar_lea.sflag [#allocation3], %s297
          %s299 = sand.u32 %s57, 1
          %s300 = smul.addr %s299, 16
          %s301 = scalar_lea.vmem [#allocation2], %s300
          %s303 = ssub.s32 256, 256
          %304 = vsyncadd %s298, %s303
          %s305 = smul.addr %s21, 2
          %s306 = smul.addr %s305, 128
          %s307 = scalar_lea.hbm %s1, %s306
          %s308 = sshll.u32 %s301, 4
          %s309 = int_to_ptr.vmem [resolvable:$true] %s308
          %314 = dma.hbm_to_vmem [thread:$0]  %s307, 256, %s309, %s298, 128, 128, 8
        $region40: #{model_forward.1} parent=31 // pred_fallthru
          _
        // Predicated region
        $region41: #{model_forward.1} parent=31 // pred_check
          %p315 = pneg %p93
        $region42: #{model_forward.1} parent=31 // pred_check_branch
          %317 = sbr.rel (%p315) target = $region44
        $region43: #{model_forward.1} parent=31 // pred_region
          %p318 = scmp.lt.s32.totalorder %s21, 3
          %s319 = scalar_select %p318, %s21, 3
          %s320 = smul.addr %s319, 2
          %s321 = scalar_lea.vmem %s2, %s320
        $region44: #{model_forward.1} parent=31 // pred_fallthru
          _
        // Predicated region
        $region45: #{model_forward.1} parent=31 // pred_check
          %p322 = pneg %p119
        $region46: #{model_forward.1} parent=31 // pred_check_branch
          %324 = sbr.rel (%p322) target = $region48
        $region47: #{model_forward.1} parent=31 // pred_region
          %p325 = scmp.lt.s32.totalorder %s21, 3
          %s326 = scalar_select %p325, %s21, 3
          %s327 = smul.addr %s326, 2
          %s328 = smul.addr %s327, 8
          %s329 = scalar_lea.vmem %s3, %s328
        $region48: #{model_forward.1} parent=31 // pred_fallthru
          _
      $region32: #{model_forward.1} parent=5 // pred_fallthru
        _
      %p330 = scmp.le.s32.totalorder 1, %s21
      %p331 = scmp.lt.s32.totalorder %s21, 5
      %p332 = pnand %p330, %p331
      %p333 = pneg %p332
      // Predicated region
      $region49: #{model_forward.1} parent=5 // pred_check
        _
      $region50: #{model_forward.1} parent=5 // pred_check_branch
        %335 = sbr.rel (%p332) target = $region52
      $region51: #{model_forward.1} parent=5 // pred_region
        %s336 = ssub.s32 %s21, 1
        %s337 = sand.u32 %s60, 1
        %s338 = scalar_lea.sflag [#allocation3], %s337
        %s339 = sand.u32 %s60, 1
        %s340 = smul.addr %s339, 16
        %s341 = scalar_lea.vmem [#allocation2], %s340
        // Predicated region
        $region53: #{model_forward.1} parent=51 // pred_check
          %p342 = pneg %p73
        $region54: #{model_forward.1} parent=51 // pred_check_branch
          %344 = sbr.rel (%p342) target = $region56
        $region55: #{model_forward.1} parent=51 // pred_region
          %345 = dma.done %s338, 256
        $region56: #{model_forward.1} parent=51 // pred_fallthru
          _
        // Predicated region
        $region57: #{model_forward.1} parent=51 // pred_check
          %p346 = pneg %p146
        $region58: #{model_forward.1} parent=51 // pred_check_branch
          %348 = sbr.rel (%p346) target = $region60
        $region59: #{model_forward.1} parent=51 // pred_region
          %349 = dma.done [#allocation6], 1536
        $region60: #{model_forward.1} parent=51 // pred_fallthru
          _
        // Predicated region
        $region61: #{model_forward.1} parent=51 // pred_check
          %p350 = pneg %p188
        $region62: #{model_forward.1} parent=51 // pred_check_branch
          %352 = sbr.rel (%p350) target = $region64
        $region63: #{model_forward.1} parent=51 // pred_region
          %353 = dma.done [#allocation6], 5120
        $region64: #{model_forward.1} parent=51 // pred_fallthru
          _
        %p354 = scmp.lt.s32.totalorder %s26, 3
        %s355 = scalar_select %p354, %s26, 3
        %s356 = smul.addr %s355, 2
        %s357 = smul.addr %s356, 8
        %s358 = scalar_lea.vmem %s0, %s357
        %p359 = pneg %p47
        %p360 = pneg %p44
        %s361 = sand.u32 %s60, 1
        %s362 = scalar_lea.sflag [#allocation3], %s361
        %s363 = sand.u32 %s60, 1
        %s364 = smul.addr %s363, 16
        %s365 = scalar_lea.vmem [#allocation2], %s364
        %p366 = pneg %p73
        %p367 = pneg %p70
        %p368 = scmp.lt.s32.totalorder %s26, 3
        %s369 = scalar_select %p368, %s26, 3
        %s370 = smul.addr %s369, 2
        %s371 = scalar_lea.vmem %s2, %s370
        %p372 = pneg %p99
        %p373 = pneg %p96
        %p374 = scmp.lt.s32.totalorder %s26, 3
        %s375 = scalar_select %p374, %s26, 3
        %s376 = smul.addr %s375, 2
        %s377 = smul.addr %s376, 8
        %s378 = scalar_lea.vmem %s3, %s377
        %p379 = pneg %p125
        %p380 = pneg %p122
        %p381 = pneg %p146
        %p382 = pneg %p143
        %p383 = pneg %p167
        %p384 = pneg %p164
        %p385 = pneg %p188
        %p386 = pneg %p185
        %p387 = pneg %p209
        %p388 = pneg %p206
        %p389 = pneg %p235
        %p390 = pneg %p232
        %s391 = sand.u32 %s222, 1
        %s392 = scalar_lea.sflag [#allocation4], %s391
        %s393 = sand.u32 %s222, 1
        %s394 = smul.addr %s393, 2
        %s395 = scalar_lea.vmem [#allocation8], %s394
        %p396 = scmp.lt.s32.totalorder %s26, 3
        %s397 = scalar_select %p396, %s26, 3
        %s398 = smul.addr %s397, 2
        %s399 = smul.addr %s398, 8
        %s400 = scalar_lea.vmem %s0, %s399
        %p401 = scmp.lt.s32.totalorder %s26, 3
        %s402 = scalar_select %p401, %s26, 3
        %s403 = smul.addr %s402, 2
        %s404 = scalar_lea.vmem %s2, %s403
        %p405 = scmp.lt.s32.totalorder %s26, 3
        %s406 = scalar_select %p405, %s26, 3
        %s407 = smul.addr %s406, 2
        %s408 = smul.addr %s407, 8
        %s409 = scalar_lea.vmem %s3, %s408
        %v410 = vld [vmem:[%s400] sm:$0xff]
        %v411 = vld [vmem:[%s400 + $0x8] sm:$0xff]
        %v412 = vld [vmem:[%s341] sm:$0xff]
        %v413 = vld [vmem:[%s341 + $0x8] sm:$0xff]
        %v414 = vld [vmem:[%s404] sm:$0x3]
        %v415 = vld [vmem:[%s409] sm:$0xff]
        %v416 = vld [vmem:[%s409 + $0x8] sm:$0xff]
        %v417 = vld [vmem:[%s5] sm:$0x7]
        %v418 = vld [vmem:[#allocation7] sm:$0xff]
        %v419 = vld [vmem:[#allocation7 + $0x8] sm:$0xff]
        %v420 = vld [vmem:[#allocation7 + $0x10] sm:$0xff]
        %v421 = vld [vmem:[#allocation7 + $0x18] sm:$0xff]
        %v422 = vld [vmem:[#allocation7 + $0x20] sm:$0xff]
        %v423 = vld [vmem:[#allocation7 + $0x28] sm:$0xff]
        %v424 = vld [vmem:[#allocation7 + $0x30] sm:$0xff]
        %v425 = vld [vmem:[#allocation7 + $0x38] sm:$0xff]
        %v426 = vld [vmem:[#allocation7 + $0x40] sm:$0xff]
        %v427 = vld [vmem:[#allocation7 + $0x48] sm:$0xff]
        %v428 = vld [vmem:[#allocation7 + $0x50] sm:$0xff]
        %v429 = vld [vmem:[#allocation7 + $0x58] sm:$0xff]
        %v430 = vld [vmem:[#allocation7 + $0x60] sm:$0xff]
        %v431 = vld [vmem:[#allocation7 + $0x68] sm:$0xff]
        %v432 = vld [vmem:[#allocation7 + $0x70] sm:$0xff]
        %v433 = vld [vmem:[#allocation7 + $0x78] sm:$0xff]
        %v434 = vld [vmem:[#allocation7 + $0x80] sm:$0xff]
        %v435 = vld [vmem:[#allocation7 + $0x88] sm:$0xff]
        %v436 = vld [vmem:[#allocation7 + $0x90] sm:$0xff]
        %v437 = vld [vmem:[#allocation7 + $0x98] sm:$0xff]
        %v438 = vld [vmem:[#allocation7 + $0xa0] sm:$0xff]
        %v439 = vld [vmem:[#allocation7 + $0xa8] sm:$0xff]
        %v440 = vld [vmem:[#allocation7 + $0xb0] sm:$0xff]
        %v441 = vld [vmem:[#allocation7 + $0xb8] sm:$0xff]
        %v442 = vld [vmem:[#allocation7 + $0xc0] sm:$0xff]
        %v443 = vld [vmem:[#allocation7 + $0xc8] sm:$0xff]
        %v444 = vld [vmem:[#allocation7 + $0xd0] sm:$0xff]
        %v445 = vld [vmem:[#allocation7 + $0xd8] sm:$0xff]
        %v446 = vld [vmem:[#allocation7 + $0xe0] sm:$0xff]
        %v447 = vld [vmem:[#allocation7 + $0xe8] sm:$0xff]
        %v448 = vld [vmem:[#allocation7 + $0xf0] sm:$0xff]
        %v449 = vld [vmem:[#allocation7 + $0xf8] sm:$0xff]
        %v450 = vld [vmem:[#allocation7 + $0x100] sm:$0xff]
        %v451 = vld [vmem:[#allocation7 + $0x108] sm:$0xff]
        %v452 = vld [vmem:[#allocation7 + $0x110] sm:$0xff]
        %v453 = vld [vmem:[#allocation7 + $0x118] sm:$0xff]
        %v454 = vld [vmem:[#allocation7 + $0x120] sm:$0xff]
        %v455 = vld [vmem:[#allocation7 + $0x128] sm:$0xff]
        %v456 = vld [vmem:[#allocation7 + $0x130] sm:$0xff]
        %v457 = vld [vmem:[#allocation7 + $0x138] sm:$0xff]
        %v458 = vld [vmem:[%s7] sm:$0x7]
        %v459 = vld [vmem:[#allocation5] sm:$0xff]
        %v460 = vld [vmem:[#allocation5 + $0x8] sm:$0xff]
        %v461 = vld [vmem:[#allocation5 + $0x10] sm:$0xff]
        %v462 = vld [vmem:[#allocation5 + $0x18] sm:$0xff]
        %vm463 = vcmask 261120
        %v465 = vsel %vm463, %v412, 0
        %v468 = vsel %vm463, %v413, 0
        %470 = vmatprep.subr.mxu0 0.0
        %471 = vmatpush1.msra.mxu0 %v459
        %472 = vmatprep.subr.mxu0 0.0
        %473 = vmatpush1.msra.mxu0 %v460
        %474 = vmatprep.subr.mxu0 0.0
        %475 = vmatpush1.msra.mxu0 %v461
        %476 = vmatprep.subr.mxu0 0.0
        %477 = vmatpush1.msra.mxu0 %v462
        %478 = vmatprep.subr.mxu0 0.0
        %479 = vmatpush1.msra.mxu0 0.0
        %480 = vmatprep.subr.mxu0 0.0
        %481 = vmatpush1.msra.mxu0 0.0
        %482 = vmatprep.subr.mxu0 0.0
        %483 = vmatpush1.msra.mxu0 0.0
        %484 = vmatprep.subr.mxu0 0.0
        %485 = vmatpush1.msra.mxu0 0.0
        %486 = vmatprep.subr.mxu0 0.0
        %487 = vmatpush1.msra.mxu0 0.0
        %488 = vmatprep.subr.mxu0 0.0
        %489 = vmatpush1.msra.mxu0 0.0
        %490 = vmatprep.subr.mxu0 0.0
        %491 = vmatpush1.msra.mxu0 0.0
        %492 = vmatprep.subr.mxu0 0.0
        %493 = vmatpush1.msra.mxu0 0.0
        %494 = vmatprep.subr.mxu0 0.0
        %495 = vmatpush1.msra.mxu0 0.0
        %496 = vmatprep.subr.mxu0 0.0
        %497 = vmatpush1.msra.mxu0 0.0
        %498 = vmatprep.subr.mxu0 0.0
        %499 = vmatpush1.msra.mxu0 0.0
        %500 = vmatprep.subr.mxu0 0.0
        %501 = vmatpush1.msra.mxu0 0.0
        %502 = vmatprep.subr.mxu0 0.0
        %503 = vmatpush1.msra.mxu0 0.0
        %504 = vmatprep.subr.mxu0 0.0
        %505 = vmatpush1.msra.mxu0 0.0
        %506 = vmatprep.subr.mxu0 0.0
        %507 = vmatpush1.msra.mxu0 0.0
        %508 = vmatprep.subr.mxu0 0.0
        %509 = vmatpush1.msra.mxu0 0.0
        %510 = vmatprep.subr.mxu0 0.0
        %511 = vmatpush1.msra.mxu0 0.0
        %512 = vmatprep.subr.mxu0 0.0
        %513 = vmatpush1.msra.mxu0 0.0
        %514 = vmatprep.subr.mxu0 0.0
        %515 = vmatpush1.msra.mxu0 0.0
        %516 = vmatprep.subr.mxu0 0.0
        %517 = vmatpush1.msra.mxu0 0.0
        %518 = vmatprep.subr.mxu0 0.0
        %519 = vmatpush1.msra.mxu0 0.0
        %520 = vmatprep.subr.mxu0 0.0
        %521 = vmatpush1.msra.mxu0 0.0
        %522 = vmatprep.subr.mxu0 0.0
        %523 = vmatpush1.msra.mxu0 0.0
        %524 = vmatprep.subr.mxu0 0.0
        %525 = vmatpush1.msra.mxu0 0.0
        %526 = vmatprep.subr.mxu0 0.0
        %527 = vmatpush1.msra.mxu0 0.0
        %528 = vmatprep.subr.mxu0 0.0
        %529 = vmatpush1.msra.mxu0 0.0
        %530 = vmatprep.subr.mxu0 0.0
        %531 = vmatpush1.msra.mxu0 0.0
        %532 = vmatprep.subr.mxu0 0.0
        %533 = vmatpush1.msra.mxu0 0.0
        %534 = vmatprep.mubr.f32.mxu0 0.0
        %535 = vmatmul.mubr.f32.gmra.mrb[0].mxu0 %v465
        %v536 = vpop.f32.mrb[0].mxu0
        %v537 = vadd.f32 0.0, %v536
        %v538 = vpop.f32.mrb[0].mxu0
        %539 = vmatprep.mubr.f32.mxu0 0.0
        %540 = vmatmul.mubr.f32.gmra.mrb[0].mxu0 %v468
        %v541 = vpop.f32.mrb[0].mxu0
        %v542 = vadd.f32 0.0, %v541
        %v543 = vpop.f32.mrb[0].mxu0
        %544 = vdwg.mxu0
        %v545 = vlaneseq
        %v546 = vshrl.u32 %v545, 7
        %v547 = vsub.s32 0, %v546
        %v548 = vrot.slane %v417, %v547
        %vm549 = vcmask 130048
        %v551 = vsel %vm549, %v410, 0
        %v554 = vsel %vm549, %v411, 0
        %556 = vmatprep.subr.mxu0 0.0
        %557 = vmatpush1.msra.mxu0 %v537
        %558 = vmatprep.subr.mxu0 0.0
        %559 = vmatpush1.msra.mxu0 %v542
        %560 = vmatprep.subr.mxu0 0.0
        %561 = vmatpush1.msra.mxu0 0.0
        %562 = vmatprep.subr.mxu0 0.0
        %563 = vmatpush1.msra.mxu0 0.0
        %564 = vmatprep.subr.mxu0 0.0
        %565 = vmatpush1.msra.mxu0 0.0
        %566 = vmatprep.subr.mxu0 0.0
        %567 = vmatpush1.msra.mxu0 0.0
        %568 = vmatprep.subr.mxu0 0.0
        %569 = vmatpush1.msra.mxu0 0.0
        %570 = vmatprep.subr.mxu0 0.0
        %571 = vmatpush1.msra.mxu0 0.0
        %572 = vmatprep.subr.mxu0 0.0
        %573 = vmatpush1.msra.mxu0 0.0
        %574 = vmatprep.subr.mxu0 0.0
        %575 = vmatpush1.msra.mxu0 0.0
        %576 = vmatprep.subr.mxu0 0.0
        %577 = vmatpush1.msra.mxu0 0.0
        %578 = vmatprep.subr.mxu0 0.0
        %579 = vmatpush1.msra.mxu0 0.0
        %580 = vmatprep.subr.mxu0 0.0
        %581 = vmatpush1.msra.mxu0 0.0
        %582 = vmatprep.subr.mxu0 0.0
        %583 = vmatpush1.msra.mxu0 0.0
        %584 = vmatprep.subr.mxu0 0.0
        %585 = vmatpush1.msra.mxu0 0.0
        %586 = vmatprep.subr.mxu0 0.0
        %587 = vmatpush1.msra.mxu0 0.0
        %588 = vmatprep.subr.mxu0 0.0
        %589 = vmatpush1.msra.mxu0 0.0
        %590 = vmatprep.subr.mxu0 0.0
        %591 = vmatpush1.msra.mxu0 0.0
        %592 = vmatprep.subr.mxu0 0.0
        %593 = vmatpush1.msra.mxu0 0.0
        %594 = vmatprep.subr.mxu0 0.0
        %595 = vmatpush1.msra.mxu0 0.0
        %596 = vmatprep.subr.mxu0 0.0
        %597 = vmatpush1.msra.mxu0 0.0
        %598 = vmatprep.subr.mxu0 0.0
        %599 = vmatpush1.msra.mxu0 0.0
        %600 = vmatprep.subr.mxu0 0.0
        %601 = vmatpush1.msra.mxu0 0.0
        %602 = vmatprep.subr.mxu0 0.0
        %603 = vmatpush1.msra.mxu0 0.0
        %604 = vmatprep.subr.mxu0 0.0
        %605 = vmatpush1.msra.mxu0 0.0
        %606 = vmatprep.subr.mxu0 0.0
        %607 = vmatpush1.msra.mxu0 0.0
        %608 = vmatprep.subr.mxu0 0.0
        %609 = vmatpush1.msra.mxu0 0.0
        %610 = vmatprep.subr.mxu0 0.0
        %611 = vmatpush1.msra.mxu0 0.0
        %612 = vmatprep.subr.mxu0 0.0
        %613 = vmatpush1.msra.mxu0 0.0
        %614 = vmatprep.subr.mxu0 0.0
        %615 = vmatpush1.msra.mxu0 0.0
        %616 = vmatprep.subr.mxu0 0.0
        %617 = vmatpush1.msra.mxu0 0.0
        %618 = vmatprep.subr.mxu0 0.0
        %619 = vmatpush1.msra.mxu0 0.0
        %620 = vmatprep.mubr.f32.mxu0 0.0
        %621 = vmatmul.mubr.f32.gmra.mrb[0].mxu0 %v551
        %v622 = vpop.f32.mrb[0].mxu0
        %v623 = vadd.f32 %v548, %v622
        %v624 = vpop.f32.mrb[0].mxu0
        %625 = vmatprep.mubr.f32.mxu0 0.0
        %626 = vmatmul.mubr.f32.gmra.mrb[0].mxu0 %v554
        %v627 = vpop.f32.mrb[0].mxu0
        %v628 = vadd.f32 %v548, %v627
        %v629 = vpop.f32.mrb[0].mxu0
        %630 = vdwg.mxu0
        %v631 = vmax.f32 %v623, 0.0
        %v632 = vmax.f32 %v628, 0.0
        %v634 = vsel %vm549, %v414, 0
        %636 = vmatprep.subr.mxu0 0.0
        %637 = vmatpush1.msra.mxu0 %v631
        %638 = vmatprep.subr.mxu0 0.0
        %639 = vmatpush1.msra.mxu0 %v632
        %640 = vmatprep.subr.mxu0 0.0
        %641 = vmatpush1.msra.mxu0 0.0
        %642 = vmatprep.subr.mxu0 0.0
        %643 = vmatpush1.msra.mxu0 0.0
        %644 = vmatprep.subr.mxu0 0.0
        %645 = vmatpush1.msra.mxu0 0.0
        %646 = vmatprep.subr.mxu0 0.0
        %647 = vmatpush1.msra.mxu0 0.0
        %648 = vmatprep.subr.mxu0 0.0
        %649 = vmatpush1.msra.mxu0 0.0
        %650 = vmatprep.subr.mxu0 0.0
        %651 = vmatpush1.msra.mxu0 0.0
        %652 = vmatprep.subr.mxu0 0.0
        %653 = vmatpush1.msra.mxu0 0.0
        %654 = vmatprep.subr.mxu0 0.0
        %655 = vmatpush1.msra.mxu0 0.0
        %656 = vmatprep.subr.mxu0 0.0
        %657 = vmatpush1.msra.mxu0 0.0
        %658 = vmatprep.subr.mxu0 0.0
        %659 = vmatpush1.msra.mxu0 0.0
        %660 = vmatprep.subr.mxu0 0.0
        %661 = vmatpush1.msra.mxu0 0.0
        %662 = vmatprep.subr.mxu0 0.0
        %663 = vmatpush1.msra.mxu0 0.0
        %664 = vmatprep.subr.mxu0 0.0
        %665 = vmatpush1.msra.mxu0 0.0
        %666 = vmatprep.subr.mxu0 0.0
        %667 = vmatpush1.msra.mxu0 0.0
        %668 = vmatprep.subr.mxu0 0.0
        %669 = vmatpush1.msra.mxu0 0.0
        %670 = vmatprep.subr.mxu0 0.0
        %671 = vmatpush1.msra.mxu0 0.0
        %672 = vmatprep.subr.mxu0 0.0
        %673 = vmatpush1.msra.mxu0 0.0
        %674 = vmatprep.subr.mxu0 0.0
        %675 = vmatpush1.msra.mxu0 0.0
        %676 = vmatprep.subr.mxu0 0.0
        %677 = vmatpush1.msra.mxu0 0.0
        %678 = vmatprep.subr.mxu0 0.0
        %679 = vmatpush1.msra.mxu0 0.0
        %680 = vmatprep.subr.mxu0 0.0
        %681 = vmatpush1.msra.mxu0 0.0
        %682 = vmatprep.subr.mxu0 0.0
        %683 = vmatpush1.msra.mxu0 0.0
        %684 = vmatprep.subr.mxu0 0.0
        %685 = vmatpush1.msra.mxu0 0.0
        %686 = vmatprep.subr.mxu0 0.0
        %687 = vmatpush1.msra.mxu0 0.0
        %688 = vmatprep.subr.mxu0 0.0
        %689 = vmatpush1.msra.mxu0 0.0
        %690 = vmatprep.subr.mxu0 0.0
        %691 = vmatpush1.msra.mxu0 0.0
        %692 = vmatprep.subr.mxu0 0.0
        %693 = vmatpush1.msra.mxu0 0.0
        %694 = vmatprep.subr.mxu0 0.0
        %695 = vmatpush1.msra.mxu0 0.0
        %696 = vmatprep.subr.mxu0 0.0
        %697 = vmatpush1.msra.mxu0 0.0
        %698 = vmatprep.subr.mxu0 0.0
        %699 = vmatpush1.msra.mxu0 0.0
        %700 = vmatprep.mubr.f32.mxu0 0.0
        %701 = vmatmul.mubr.f32.gmra.mrb[0].mxu0 %v634
        %v702 = vpop.f32.mrb[0].mxu0
        %v703 = vadd.f32 0.0, %v702
        %v704 = vpop.f32.mrb[0].mxu0
        %705 = vdwg.mxu0
        %707 = vset.pattern.permute.xlu0 0
        %708 = vperm.xlu0 %707, %v415
        %v709 = vpop.permute.xlu0 %708
        %712 = vset.pattern.permute.xlu0 0
        %713 = vperm.xlu0 %712, %v416
        %v714 = vpop.permute.xlu0 %713
        %v716 = vmul.f32 %v631, %v709
        %v717 = vmul.f32 %v632, %v714
        %v718 = vsel %vm463, %v716, -inf
        %v719 = vsel %vm463, %v717, -inf
        %v720 = vmax.f32 %v718, %v719
        %v721 = vrot.slane %v720, 4
        %v722 = vmax.f32 %v720, %v721
        %v723 = vrot.slane %v722, 2
        %v724 = vmax.f32 %v722, %v723
        %v725 = vrot.slane %v724, 1
        %v726 = vmax.f32 %v724, %v725
        %727 = vset.pattern.permute.xlu0 1
        %728 = vperm.xlu0 %727, %v415
        %v729 = vpop.permute.xlu0 %728
        %731 = vset.pattern.permute.xlu0 1
        %732 = vperm.xlu0 %731, %v416
        %v733 = vpop.permute.xlu0 %732
        %v735 = vmul.f32 %v631, %v729
        %v736 = vmul.f32 %v632, %v733
        %v737 = vsel %vm463, %v735, -inf
        %v738 = vsel %vm463, %v736, -inf
        %v739 = vmax.f32 %v737, %v738
        %v740 = vrot.slane %v739, 4
        %v741 = vmax.f32 %v739, %v740
        %v742 = vrot.slane %v741, 2
        %v743 = vmax.f32 %v741, %v742
        %v744 = vrot.slane %v743, 1
        %v745 = vmax.f32 %v743, %v744
        %vm746 = vcmask 1040384
        %v747 = vsel %vm746, %v726, %v745
        %v748 = vmax.f32 %v747, 0.0
        %v749 = vadd.f32 %v748, 0.0
        %v750 = vmax.f32 %v703, 0.0
        %v751 = vadd.f32 %v750, 0.0
        %s752 = scalar_lea.vmem [#allocation5], 32
        %v753 = vld [vmem:[%s752] sm:$0xff]
        %v754 = vld [vmem:[%s752 + $0x8] sm:$0xff]
        %v755 = vld [vmem:[%s752 + $0x10] sm:$0xff]
        %v756 = vld [vmem:[%s752 + $0x18] sm:$0xff]
        %v758 = vsel %vm463, %v631, 0
        %v761 = vsel %vm463, %v632, 0
        %763 = vmatprep.subr.mxu0 0.0
        %764 = vmatpush1.msra.mxu0 %v753
        %765 = vmatprep.subr.mxu0 0.0
        %766 = vmatpush1.msra.mxu0 %v754
        %767 = vmatprep.subr.mxu0 0.0
        %768 = vmatpush1.msra.mxu0 %v755
        %769 = vmatprep.subr.mxu0 0.0
        %770 = vmatpush1.msra.mxu0 %v756
        %771 = vmatprep.subr.mxu0 0.0
        %772 = vmatpush1.msra.mxu0 0.0
        %773 = vmatprep.subr.mxu0 0.0
        %774 = vmatpush1.msra.mxu0 0.0
        %775 = vmatprep.subr.mxu0 0.0
        %776 = vmatpush1.msra.mxu0 0.0
        %777 = vmatprep.subr.mxu0 0.0
        %778 = vmatpush1.msra.mxu0 0.0
        %779 = vmatprep.subr.mxu0 0.0
        %780 = vmatpush1.msra.mxu0 0.0
        %781 = vmatprep.subr.mxu0 0.0
        %782 = vmatpush1.msra.mxu0 0.0
        %783 = vmatprep.subr.mxu0 0.0
        %784 = vmatpush1.msra.mxu0 0.0
        %785 = vmatprep.subr.mxu0 0.0
        %786 = vmatpush1.msra.mxu0 0.0
        %787 = vmatprep.subr.mxu0 0.0
        %788 = vmatpush1.msra.mxu0 0.0
        %789 = vmatprep.subr.mxu0 0.0
        %790 = vmatpush1.msra.mxu0 0.0
        %791 = vmatprep.subr.mxu0 0.0
        %792 = vmatpush1.msra.mxu0 0.0
        %793 = vmatprep.subr.mxu0 0.0
        %794 = vmatpush1.msra.mxu0 0.0
        %795 = vmatprep.subr.mxu0 0.0
        %796 = vmatpush1.msra.mxu0 0.0
        %797 = vmatprep.subr.mxu0 0.0
        %798 = vmatpush1.msra.mxu0 0.0
        %799 = vmatprep.subr.mxu0 0.0
        %800 = vmatpush1.msra.mxu0 0.0
        %801 = vmatprep.subr.mxu0 0.0
        %802 = vmatpush1.msra.mxu0 0.0
        %803 = vmatprep.subr.mxu0 0.0
        %804 = vmatpush1.msra.mxu0 0.0
        %805 = vmatprep.subr.mxu0 0.0
        %806 = vmatpush1.msra.mxu0 0.0
        %807 = vmatprep.subr.mxu0 0.0
        %808 = vmatpush1.msra.mxu0 0.0
        %809 = vmatprep.subr.mxu0 0.0
        %810 = vmatpush1.msra.mxu0 0.0
        %811 = vmatprep.subr.mxu0 0.0
        %812 = vmatpush1.msra.mxu0 0.0
        %813 = vmatprep.subr.mxu0 0.0
        %814 = vmatpush1.msra.mxu0 0.0
        %815 = vmatprep.subr.mxu0 0.0
        %816 = vmatpush1.msra.mxu0 0.0
        %817 = vmatprep.subr.mxu0 0.0
        %818 = vmatpush1.msra.mxu0 0.0
        %819 = vmatprep.subr.mxu0 0.0
        %820 = vmatpush1.msra.mxu0 0.0
        %821 = vmatprep.subr.mxu0 0.0
        %822 = vmatpush1.msra.mxu0 0.0
        %823 = vmatprep.subr.mxu0 0.0
        %824 = vmatpush1.msra.mxu0 0.0
        %825 = vmatprep.subr.mxu0 0.0
        %826 = vmatpush1.msra.mxu0 0.0
        %827 = vmatprep.mubr.f32.mxu0 0.0
        %828 = vmatmul.mubr.f32.gmra.mrb[0].mxu0 %v758
        %v829 = vpop.f32.mrb[0].mxu0
        %v830 = vadd.f32 0.0, %v829
        %v831 = vpop.f32.mrb[0].mxu0
        %832 = vmatprep.mubr.f32.mxu0 0.0
        %833 = vmatmul.mubr.f32.gmra.mrb[0].mxu0 %v761
        %v834 = vpop.f32.mrb[0].mxu0
        %v835 = vadd.f32 0.0, %v834
        %v836 = vpop.f32.mrb[0].mxu0
        %837 = vdwg.mxu0
        %v838 = vlaneseq
        %v839 = vshrl.u32 %v838, 7
        %v840 = vsub.s32 1, %v839
        %v841 = vrot.slane %v417, %v840
        %842 = vmatprep.subr.mxu0 0.0
        %843 = vmatpush1.msra.mxu0 %v830
        %844 = vmatprep.subr.mxu0 0.0
        %845 = vmatpush1.msra.mxu0 %v835
        %846 = vmatprep.subr.mxu0 0.0
        %847 = vmatpush1.msra.mxu0 0.0
        %848 = vmatprep.subr.mxu0 0.0
        %849 = vmatpush1.msra.mxu0 0.0
        %850 = vmatprep.subr.mxu0 0.0
        %851 = vmatpush1.msra.mxu0 0.0
        %852 = vmatprep.subr.mxu0 0.0
        %853 = vmatpush1.msra.mxu0 0.0
        %854 = vmatprep.subr.mxu0 0.0
        %855 = vmatpush1.msra.mxu0 0.0
        %856 = vmatprep.subr.mxu0 0.0
        %857 = vmatpush1.msra.mxu0 0.0
        %858 = vmatprep.subr.mxu0 0.0
        %859 = vmatpush1.msra.mxu0 0.0
        %860 = vmatprep.subr.mxu0 0.0
        %861 = vmatpush1.msra.mxu0 0.0
        %862 = vmatprep.subr.mxu0 0.0
        %863 = vmatpush1.msra.mxu0 0.0
        %864 = vmatprep.subr.mxu0 0.0
        %865 = vmatpush1.msra.mxu0 0.0
        %866 = vmatprep.subr.mxu0 0.0
        %867 = vmatpush1.msra.mxu0 0.0
        %868 = vmatprep.subr.mxu0 0.0
        %869 = vmatpush1.msra.mxu0 0.0
        %870 = vmatprep.subr.mxu0 0.0
        %871 = vmatpush1.msra.mxu0 0.0
        %872 = vmatprep.subr.mxu0 0.0
        %873 = vmatpush1.msra.mxu0 0.0
        %874 = vmatprep.subr.mxu0 0.0
        %875 = vmatpush1.msra.mxu0 0.0
        %876 = vmatprep.subr.mxu0 0.0
        %877 = vmatpush1.msra.mxu0 0.0
        %878 = vmatprep.subr.mxu0 0.0
        %879 = vmatpush1.msra.mxu0 0.0
        %880 = vmatprep.subr.mxu0 0.0
        %881 = vmatpush1.msra.mxu0 0.0
        %882 = vmatprep.subr.mxu0 0.0
        %883 = vmatpush1.msra.mxu0 0.0
        %884 = vmatprep.subr.mxu0 0.0
        %885 = vmatpush1.msra.mxu0 0.0
        %886 = vmatprep.subr.mxu0 0.0
        %887 = vmatpush1.msra.mxu0 0.0
        %888 = vmatprep.subr.mxu0 0.0
        %889 = vmatpush1.msra.mxu0 0.0
        %890 = vmatprep.subr.mxu0 0.0
        %891 = vmatpush1.msra.mxu0 0.0
        %892 = vmatprep.subr.mxu0 0.0
        %893 = vmatpush1.msra.mxu0 0.0
        %894 = vmatprep.subr.mxu0 0.0
        %895 = vmatpush1.msra.mxu0 0.0
        %896 = vmatprep.subr.mxu0 0.0
        %897 = vmatpush1.msra.mxu0 0.0
        %898 = vmatprep.subr.mxu0 0.0
        %899 = vmatpush1.msra.mxu0 0.0
        %900 = vmatprep.subr.mxu0 0.0
        %901 = vmatpush1.msra.mxu0 0.0
        %902 = vmatprep.subr.mxu0 0.0
        %903 = vmatpush1.msra.mxu0 0.0
        %904 = vmatprep.subr.mxu0 0.0
        %905 = vmatpush1.msra.mxu0 0.0
        %906 = vmatprep.mubr.f32.mxu0 0.0
        %907 = vmatmul.mubr.f32.gmra.mrb[0].mxu0 %v551
        %v908 = vpop.f32.mrb[0].mxu0
        %v909 = vadd.f32 %v841, %v908
        %v910 = vpop.f32.mrb[0].mxu0
        %911 = vmatprep.mubr.f32.mxu0 0.0
        %912 = vmatmul.mubr.f32.gmra.mrb[0].mxu0 %v554
        %v913 = vpop.f32.mrb[0].mxu0
        %v914 = vadd.f32 %v841, %v913
        %v915 = vpop.f32.mrb[0].mxu0
        %916 = vdwg.mxu0
        %v917 = vmax.f32 %v909, 0.0
        %v918 = vmax.f32 %v914, 0.0
        %919 = vmatprep.subr.mxu0 0.0
        %920 = vmatpush1.msra.mxu0 %v917
        %921 = vmatprep.subr.mxu0 0.0
        %922 = vmatpush1.msra.mxu0 %v918
        %923 = vmatprep.subr.mxu0 0.0
        %924 = vmatpush1.msra.mxu0 0.0
        %925 = vmatprep.subr.mxu0 0.0
        %926 = vmatpush1.msra.mxu0 0.0
        %927 = vmatprep.subr.mxu0 0.0
        %928 = vmatpush1.msra.mxu0 0.0
        %929 = vmatprep.subr.mxu0 0.0
        %930 = vmatpush1.msra.mxu0 0.0
        %931 = vmatprep.subr.mxu0 0.0
        %932 = vmatpush1.msra.mxu0 0.0
        %933 = vmatprep.subr.mxu0 0.0
        %934 = vmatpush1.msra.mxu0 0.0
        %935 = vmatprep.subr.mxu0 0.0
        %936 = vmatpush1.msra.mxu0 0.0
        %937 = vmatprep.subr.mxu0 0.0
        %938 = vmatpush1.msra.mxu0 0.0
        %939 = vmatprep.subr.mxu0 0.0
        %940 = vmatpush1.msra.mxu0 0.0
        %941 = vmatprep.subr.mxu0 0.0
        %942 = vmatpush1.msra.mxu0 0.0
        %943 = vmatprep.subr.mxu0 0.0
        %944 = vmatpush1.msra.mxu0 0.0
        %945 = vmatprep.subr.mxu0 0.0
        %946 = vmatpush1.msra.mxu0 0.0
        %947 = vmatprep.subr.mxu0 0.0
        %948 = vmatpush1.msra.mxu0 0.0
        %949 = vmatprep.subr.mxu0 0.0
        %950 = vmatpush1.msra.mxu0 0.0
        %951 = vmatprep.subr.mxu0 0.0
        %952 = vmatpush1.msra.mxu0 0.0
        %953 = vmatprep.subr.mxu0 0.0
        %954 = vmatpush1.msra.mxu0 0.0
        %955 = vmatprep.subr.mxu0 0.0
        %956 = vmatpush1.msra.mxu0 0.0
        %957 = vmatprep.subr.mxu0 0.0
        %958 = vmatpush1.msra.mxu0 0.0
        %959 = vmatprep.subr.mxu0 0.0
        %960 = vmatpush1.msra.mxu0 0.0
        %961 = vmatprep.subr.mxu0 0.0
        %962 = vmatpush1.msra.mxu0 0.0
        %963 = vmatprep.subr.mxu0 0.0
        %964 = vmatpush1.msra.mxu0 0.0
        %965 = vmatprep.subr.mxu0 0.0
        %966 = vmatpush1.msra.mxu0 0.0
        %967 = vmatprep.subr.mxu0 0.0
        %968 = vmatpush1.msra.mxu0 0.0
        %969 = vmatprep.subr.mxu0 0.0
        %970 = vmatpush1.msra.mxu0 0.0
        %971 = vmatprep.subr.mxu0 0.0
        %972 = vmatpush1.msra.mxu0 0.0
        %973 = vmatprep.subr.mxu0 0.0
        %974 = vmatpush1.msra.mxu0 0.0
        %975 = vmatprep.subr.mxu0 0.0
        %976 = vmatpush1.msra.mxu0 0.0
        %977 = vmatprep.subr.mxu0 0.0
        %978 = vmatpush1.msra.mxu0 0.0
        %979 = vmatprep.subr.mxu0 0.0
        %980 = vmatpush1.msra.mxu0 0.0
        %981 = vmatprep.subr.mxu0 0.0
        %982 = vmatpush1.msra.mxu0 0.0
        %983 = vmatprep.mubr.f32.mxu0 0.0
        %984 = vmatmul.mubr.f32.gmra.mrb[0].mxu0 %v634
        %v985 = vpop.f32.mrb[0].mxu0
        %v986 = vadd.f32 0.0, %v985
        %v987 = vpop.f32.mrb[0].mxu0
        %988 = vdwg.mxu0
        %v989 = vmul.f32 %v917, %v709
        %v990 = vmul.f32 %v918, %v714
        %v991 = vsel %vm463, %v989, -inf
        %v992 = vsel %vm463, %v990, -inf
        %v993 = vmax.f32 %v991, %v992
        %v994 = vrot.slane %v993, 4
        %v995 = vmax.f32 %v993, %v994
        %v996 = vrot.slane %v995, 2
        %v997 = vmax.f32 %v995, %v996
        %v998 = vrot.slane %v997, 1
        %v999 = vmax.f32 %v997, %v998
        %v1000 = vmul.f32 %v917, %v729
        %v1001 = vmul.f32 %v918, %v733
        %v1002 = vsel %vm463, %v1000, -inf
        %v1003 = vsel %vm463, %v1001, -inf
        %v1004 = vmax.f32 %v1002, %v1003
        %v1005 = vrot.slane %v1004, 4
        %v1006 = vmax.f32 %v1004, %v1005
        %v1007 = vrot.slane %v1006, 2
        %v1008 = vmax.f32 %v1006, %v1007
        %v1009 = vrot.slane %v1008, 1
        %v1010 = vmax.f32 %v1008, %v1009
        %v1011 = vsel %vm746, %v999, %v1010
        %v1012 = vmax.f32 %v1011, 0.0
        %v1013 = vadd.f32 %v749, %v1012
        %v1014 = vmax.f32 %v986, 0.0
        %v1015 = vadd.f32 %v751, %v1014
        %s1016 = scalar_lea.vmem [#allocation5], 64
        %v1017 = vld [vmem:[%s1016] sm:$0xff]
        %v1018 = vld [vmem:[%s1016 + $0x8] sm:$0xff]
        %v1019 = vld [vmem:[%s1016 + $0x10] sm:$0xff]
        %v1020 = vld [vmem:[%s1016 + $0x18] sm:$0xff]
        %v1022 = vsel %vm463, %v917, 0
        %v1025 = vsel %vm463, %v918, 0
        %1027 = vmatprep.subr.mxu0 0.0
        %1028 = vmatpush1.msra.mxu0 %v1017
        %1029 = vmatprep.subr.mxu0 0.0
        %1030 = vmatpush1.msra.mxu0 %v1018
        %1031 = vmatprep.subr.mxu0 0.0
        %1032 = vmatpush1.msra.mxu0 %v1019
        %1033 = vmatprep.subr.mxu0 0.0
        %1034 = vmatpush1.msra.mxu0 %v1020
        %1035 = vmatprep.subr.mxu0 0.0
        %1036 = vmatpush1.msra.mxu0 0.0
        %1037 = vmatprep.subr.mxu0 0.0
        %1038 = vmatpush1.msra.mxu0 0.0
        %1039 = vmatprep.subr.mxu0 0.0
        %1040 = vmatpush1.msra.mxu0 0.0
        %1041 = vmatprep.subr.mxu0 0.0
        %1042 = vmatpush1.msra.mxu0 0.0
        %1043 = vmatprep.subr.mxu0 0.0
        %1044 = vmatpush1.msra.mxu0 0.0
        %1045 = vmatprep.subr.mxu0 0.0
        %1046 = vmatpush1.msra.mxu0 0.0
        %1047 = vmatprep.subr.mxu0 0.0
        %1048 = vmatpush1.msra.mxu0 0.0
        %1049 = vmatprep.subr.mxu0 0.0
        %1050 = vmatpush1.msra.mxu0 0.0
        %1051 = vmatprep.subr.mxu0 0.0
        %1052 = vmatpush1.msra.mxu0 0.0
        %1053 = vmatprep.subr.mxu0 0.0
        %1054 = vmatpush1.msra.mxu0 0.0
        %1055 = vmatprep.subr.mxu0 0.0
        %1056 = vmatpush1.msra.mxu0 0.0
        %1057 = vmatprep.subr.mxu0 0.0
        %1058 = vmatpush1.msra.mxu0 0.0
        %1059 = vmatprep.subr.mxu0 0.0
        %1060 = vmatpush1.msra.mxu0 0.0
        %1061 = vmatprep.subr.mxu0 0.0
        %1062 = vmatpush1.msra.mxu0 0.0
        %1063 = vmatprep.subr.mxu0 0.0
        %1064 = vmatpush1.msra.mxu0 0.0
        %1065 = vmatprep.subr.mxu0 0.0
        %1066 = vmatpush1.msra.mxu0 0.0
        %1067 = vmatprep.subr.mxu0 0.0
        %1068 = vmatpush1.msra.mxu0 0.0
        %1069 = vmatprep.subr.mxu0 0.0
        %1070 = vmatpush1.msra.mxu0 0.0
        %1071 = vmatprep.subr.mxu0 0.0
        %1072 = vmatpush1.msra.mxu0 0.0
        %1073 = vmatprep.subr.mxu0 0.0
        %1074 = vmatpush1.msra.mxu0 0.0
        %1075 = vmatprep.subr.mxu0 0.0
        %1076 = vmatpush1.msra.mxu0 0.0
        %1077 = vmatprep.subr.mxu0 0.0
        %1078 = vmatpush1.msra.mxu0 0.0
        %1079 = vmatprep.subr.mxu0 0.0
        %1080 = vmatpush1.msra.mxu0 0.0
        %1081 = vmatprep.subr.mxu0 0.0
        %1082 = vmatpush1.msra.mxu0 0.0
        %1083 = vmatprep.subr.mxu0 0.0
        %1084 = vmatpush1.msra.mxu0 0.0
        %1085 = vmatprep.subr.mxu0 0.0
        %1086 = vmatpush1.msra.mxu0 0.0
        %1087 = vmatprep.subr.mxu0 0.0
        %1088 = vmatpush1.msra.mxu0 0.0
        %1089 = vmatprep.subr.mxu0 0.0
        %1090 = vmatpush1.msra.mxu0 0.0
        %1091 = vmatprep.mubr.f32.mxu0 0.0
        %1092 = vmatmul.mubr.f32.gmra.mrb[0].mxu0 %v1022
        %v1093 = vpop.f32.mrb[0].mxu0
        %v1094 = vadd.f32 0.0, %v1093
        %v1095 = vpop.f32.mrb[0].mxu0
        %1096 = vmatprep.mubr.f32.mxu0 0.0
        %1097 = vmatmul.mubr.f32.gmra.mrb[0].mxu0 %v1025
        %v1098 = vpop.f32.mrb[0].mxu0
        %v1099 = vadd.f32 0.0, %v1098
        %v1100 = vpop.f32.mrb[0].mxu0
        %1101 = vdwg.mxu0
        %v1102 = vlaneseq
        %v1103 = vshrl.u32 %v1102, 7
        %v1104 = vsub.s32 2, %v1103
        %v1105 = vrot.slane %v417, %v1104
        %1106 = vmatprep.subr.mxu0 0.0
        %1107 = vmatpush1.msra.mxu0 %v1094
        %1108 = vmatprep.subr.mxu0 0.0
        %1109 = vmatpush1.msra.mxu0 %v1099
        %1110 = vmatprep.subr.mxu0 0.0
        %1111 = vmatpush1.msra.mxu0 0.0
        %1112 = vmatprep.subr.mxu0 0.0
        %1113 = vmatpush1.msra.mxu0 0.0
        %1114 = vmatprep.subr.mxu0 0.0
        %1115 = vmatpush1.msra.mxu0 0.0
        %1116 = vmatprep.subr.mxu0 0.0
        %1117 = vmatpush1.msra.mxu0 0.0
        %1118 = vmatprep.subr.mxu0 0.0
        %1119 = vmatpush1.msra.mxu0 0.0
        %1120 = vmatprep.subr.mxu0 0.0
        %1121 = vmatpush1.msra.mxu0 0.0
        %1122 = vmatprep.subr.mxu0 0.0
        %1123 = vmatpush1.msra.mxu0 0.0
        %1124 = vmatprep.subr.mxu0 0.0
        %1125 = vmatpush1.msra.mxu0 0.0
        %1126 = vmatprep.subr.mxu0 0.0
        %1127 = vmatpush1.msra.mxu0 0.0
        %1128 = vmatprep.subr.mxu0 0.0
        %1129 = vmatpush1.msra.mxu0 0.0
        %1130 = vmatprep.subr.mxu0 0.0
        %1131 = vmatpush1.msra.mxu0 0.0
        %1132 = vmatprep.subr.mxu0 0.0
        %1133 = vmatpush1.msra.mxu0 0.0
        %1134 = vmatprep.subr.mxu0 0.0
        %1135 = vmatpush1.msra.mxu0 0.0
        %1136 = vmatprep.subr.mxu0 0.0
        %1137 = vmatpush1.msra.mxu0 0.0
        %1138 = vmatprep.subr.mxu0 0.0
        %1139 = vmatpush1.msra.mxu0 0.0
        %1140 = vmatprep.subr.mxu0 0.0
        %1141 = vmatpush1.msra.mxu0 0.0
        %1142 = vmatprep.subr.mxu0 0.0
        %1143 = vmatpush1.msra.mxu0 0.0
        %1144 = vmatprep.subr.mxu0 0.0
        %1145 = vmatpush1.msra.mxu0 0.0
        %1146 = vmatprep.subr.mxu0 0.0
        %1147 = vmatpush1.msra.mxu0 0.0
        %1148 = vmatprep.subr.mxu0 0.0
        %1149 = vmatpush1.msra.mxu0 0.0
        %1150 = vmatprep.subr.mxu0 0.0
        %1151 = vmatpush1.msra.mxu0 0.0
        %1152 = vmatprep.subr.mxu0 0.0
        %1153 = vmatpush1.msra.mxu0 0.0
        %1154 = vmatprep.subr.mxu0 0.0
        %1155 = vmatpush1.msra.mxu0 0.0
        %1156 = vmatprep.subr.mxu0 0.0
        %1157 = vmatpush1.msra.mxu0 0.0
        %1158 = vmatprep.subr.mxu0 0.0
        %1159 = vmatpush1.msra.mxu0 0.0
        %1160 = vmatprep.subr.mxu0 0.0
        %1161 = vmatpush1.msra.mxu0 0.0
        %1162 = vmatprep.subr.mxu0 0.0
        %1163 = vmatpush1.msra.mxu0 0.0
        %1164 = vmatprep.subr.mxu0 0.0
        %1165 = vmatpush1.msra.mxu0 0.0
        %1166 = vmatprep.subr.mxu0 0.0
        %1167 = vmatpush1.msra.mxu0 0.0
        %1168 = vmatprep.subr.mxu0 0.0
        %1169 = vmatpush1.msra.mxu0 0.0
        %1170 = vmatprep.mubr.f32.mxu0 0.0
        %1171 = vmatmul.mubr.f32.gmra.mrb[0].mxu0 %v551
        %v1172 = vpop.f32.mrb[0].mxu0
        %v1173 = vadd.f32 %v1105, %v1172
        %v1174 = vpop.f32.mrb[0].mxu0
        %1175 = vmatprep.mubr.f32.mxu0 0.0
        %1176 = vmatmul.mubr.f32.gmra.mrb[0].mxu0 %v554
        %v1177 = vpop.f32.mrb[0].mxu0
        %v1178 = vadd.f32 %v1105, %v1177
        %v1179 = vpop.f32.mrb[0].mxu0
        %1180 = vdwg.mxu0
        %v1181 = vmax.f32 %v1173, 0.0
        %v1182 = vmax.f32 %v1178, 0.0
        %1183 = vmatprep.subr.mxu0 0.0
        %1184 = vmatpush1.msra.mxu0 %v1181
        %1185 = vmatprep.subr.mxu0 0.0
        %1186 = vmatpush1.msra.mxu0 %v1182
        %1187 = vmatprep.subr.mxu0 0.0
        %1188 = vmatpush1.msra.mxu0 0.0
        %1189 = vmatprep.subr.mxu0 0.0
        %1190 = vmatpush1.msra.mxu0 0.0
        %1191 = vmatprep.subr.mxu0 0.0
        %1192 = vmatpush1.msra.mxu0 0.0
        %1193 = vmatprep.subr.mxu0 0.0
        %1194 = vmatpush1.msra.mxu0 0.0
        %1195 = vmatprep.subr.mxu0 0.0
        %1196 = vmatpush1.msra.mxu0 0.0
        %1197 = vmatprep.subr.mxu0 0.0
        %1198 = vmatpush1.msra.mxu0 0.0
        %1199 = vmatprep.subr.mxu0 0.0
        %1200 = vmatpush1.msra.mxu0 0.0
        %1201 = vmatprep.subr.mxu0 0.0
        %1202 = vmatpush1.msra.mxu0 0.0
        %1203 = vmatprep.subr.mxu0 0.0
        %1204 = vmatpush1.msra.mxu0 0.0
        %1205 = vmatprep.subr.mxu0 0.0
        %1206 = vmatpush1.msra.mxu0 0.0
        %1207 = vmatprep.subr.mxu0 0.0
        %1208 = vmatpush1.msra.mxu0 0.0
        %1209 = vmatprep.subr.mxu0 0.0
        %1210 = vmatpush1.msra.mxu0 0.0
        %1211 = vmatprep.subr.mxu0 0.0
        %1212 = vmatpush1.msra.mxu0 0.0
        %1213 = vmatprep.subr.mxu0 0.0
        %1214 = vmatpush1.msra.mxu0 0.0
        %1215 = vmatprep.subr.mxu0 0.0
        %1216 = vmatpush1.msra.mxu0 0.0
        %1217 = vmatprep.subr.mxu0 0.0
        %1218 = vmatpush1.msra.mxu0 0.0
        %1219 = vmatprep.subr.mxu0 0.0
        %1220 = vmatpush1.msra.mxu0 0.0
        %1221 = vmatprep.subr.mxu0 0.0
        %1222 = vmatpush1.msra.mxu0 0.0
        %1223 = vmatprep.subr.mxu0 0.0
        %1224 = vmatpush1.msra.mxu0 0.0
        %1225 = vmatprep.subr.mxu0 0.0
        %1226 = vmatpush1.msra.mxu0 0.0
        %1227 = vmatprep.subr.mxu0 0.0
        %1228 = vmatpush1.msra.mxu0 0.0
        %1229 = vmatprep.subr.mxu0 0.0
        %1230 = vmatpush1.msra.mxu0 0.0
        %1231 = vmatprep.subr.mxu0 0.0
        %1232 = vmatpush1.msra.mxu0 0.0
        %1233 = vmatprep.subr.mxu0 0.0
        %1234 = vmatpush1.msra.mxu0 0.0
        %1235 = vmatprep.subr.mxu0 0.0
        %1236 = vmatpush1.msra.mxu0 0.0
        %1237 = vmatprep.subr.mxu0 0.0
        %1238 = vmatpush1.msra.mxu0 0.0
        %1239 = vmatprep.subr.mxu0 0.0
        %1240 = vmatpush1.msra.mxu0 0.0
        %1241 = vmatprep.subr.mxu0 0.0
        %1242 = vmatpush1.msra.mxu0 0.0
        %1243 = vmatprep.subr.mxu0 0.0
        %1244 = vmatpush1.msra.mxu0 0.0
        %1245 = vmatprep.subr.mxu0 0.0
        %1246 = vmatpush1.msra.mxu0 0.0
        %1247 = vmatprep.mubr.f32.mxu0 0.0
        %1248 = vmatmul.mubr.f32.gmra.mrb[0].mxu0 %v634
        %v1249 = vpop.f32.mrb[0].mxu0
        %v1250 = vadd.f32 0.0, %v1249
        %v1251 = vpop.f32.mrb[0].mxu0
        %1252 = vdwg.mxu0
        %v1253 = vmul.f32 %v1181, %v709
        %v1254 = vmul.f32 %v1182, %v714
        %v1255 = vsel %vm463, %v1253, -inf
        %v1256 = vsel %vm463, %v1254, -inf
        %v1257 = vmax.f32 %v1255, %v1256
        %v1258 = vrot.slane %v1257, 4
        %v1259 = vmax.f32 %v1257, %v1258
        %v1260 = vrot.slane %v1259, 2
        %v1261 = vmax.f32 %v1259, %v1260
        %v1262 = vrot.slane %v1261, 1
        %v1263 = vmax.f32 %v1261, %v1262
        %v1264 = vmul.f32 %v1181, %v729
        %v1265 = vmul.f32 %v1182, %v733
        %v1266 = vsel %vm463, %v1264, -inf
        %v1267 = vsel %vm463, %v1265, -inf
        %v1268 = vmax.f32 %v1266, %v1267
        %v1269 = vrot.slane %v1268, 4
        %v1270 = vmax.f32 %v1268, %v1269
        %v1271 = vrot.slane %v1270, 2
        %v1272 = vmax.f32 %v1270, %v1271
        %v1273 = vrot.slane %v1272, 1
        %v1274 = vmax.f32 %v1272, %v1273
        %v1275 = vsel %vm746, %v1263, %v1274
        %v1276 = vmax.f32 %v1275, 0.0
        %v1277 = vadd.f32 %v1013, %v1276
        %v1278 = vmax.f32 %v1250, 0.0
        %v1279 = vadd.f32 %v1015, %v1278
        %v1281 = vsel %vm463, %v1279, 0
        %1283 = vmatprep.subr.mxu0 0.0
        %1284 = vmatpush1.msra.mxu0 %v422
        %1285 = vmatprep.subr.mxu0 0.0
        %1286 = vmatpush1.msra.mxu0 %v423
        %1287 = vmatprep.subr.mxu0 0.0
        %1288 = vmatpush1.msra.mxu0 %v424
        %1289 = vmatprep.subr.mxu0 0.0
        %1290 = vmatpush1.msra.mxu0 %v425
        %1291 = vmatprep.subr.mxu0 0.0
        %1292 = vmatpush1.msra.mxu0 0.0
        %1293 = vmatprep.subr.mxu0 0.0
        %1294 = vmatpush1.msra.mxu0 0.0
        %1295 = vmatprep.subr.mxu0 0.0
        %1296 = vmatpush1.msra.mxu0 0.0
        %1297 = vmatprep.subr.mxu0 0.0
        %1298 = vmatpush1.msra.mxu0 0.0
        %1299 = vmatprep.subr.mxu0 0.0
        %1300 = vmatpush1.msra.mxu0 0.0
        %1301 = vmatprep.subr.mxu0 0.0
        %1302 = vmatpush1.msra.mxu0 0.0
        %1303 = vmatprep.subr.mxu0 0.0
        %1304 = vmatpush1.msra.mxu0 0.0
        %1305 = vmatprep.subr.mxu0 0.0
        %1306 = vmatpush1.msra.mxu0 0.0
        %1307 = vmatprep.subr.mxu0 0.0
        %1308 = vmatpush1.msra.mxu0 0.0
        %1309 = vmatprep.subr.mxu0 0.0
        %1310 = vmatpush1.msra.mxu0 0.0
        %1311 = vmatprep.subr.mxu0 0.0
        %1312 = vmatpush1.msra.mxu0 0.0
        %1313 = vmatprep.subr.mxu0 0.0
        %1314 = vmatpush1.msra.mxu0 0.0
        %1315 = vmatprep.subr.mxu0 0.0
        %1316 = vmatpush1.msra.mxu0 0.0
        %1317 = vmatprep.subr.mxu0 0.0
        %1318 = vmatpush1.msra.mxu0 0.0
        %1319 = vmatprep.subr.mxu0 0.0
        %1320 = vmatpush1.msra.mxu0 0.0
        %1321 = vmatprep.subr.mxu0 0.0
        %1322 = vmatpush1.msra.mxu0 0.0
        %1323 = vmatprep.subr.mxu0 0.0
        %1324 = vmatpush1.msra.mxu0 0.0
        %1325 = vmatprep.subr.mxu0 0.0
        %1326 = vmatpush1.msra.mxu0 0.0
        %1327 = vmatprep.subr.mxu0 0.0
        %1328 = vmatpush1.msra.mxu0 0.0
        %1329 = vmatprep.subr.mxu0 0.0
        %1330 = vmatpush1.msra.mxu0 0.0
        %1331 = vmatprep.subr.mxu0 0.0
        %1332 = vmatpush1.msra.mxu0 0.0
        %1333 = vmatprep.subr.mxu0 0.0
        %1334 = vmatpush1.msra.mxu0 0.0
        %1335 = vmatprep.subr.mxu0 0.0
        %1336 = vmatpush1.msra.mxu0 0.0
        %1337 = vmatprep.subr.mxu0 0.0
        %1338 = vmatpush1.msra.mxu0 0.0
        %1339 = vmatprep.subr.mxu0 0.0
        %1340 = vmatpush1.msra.mxu0 0.0
        %1341 = vmatprep.subr.mxu0 0.0
        %1342 = vmatpush1.msra.mxu0 0.0
        %1343 = vmatprep.subr.mxu0 0.0
        %1344 = vmatpush1.msra.mxu0 0.0
        %1345 = vmatprep.subr.mxu0 0.0
        %1346 = vmatpush1.msra.mxu0 0.0
        %1347 = vmatprep.mubr.f32.mxu0 0.0
        %1348 = vmatmul.mubr.f32.gmra.mrb[0].mxu0 %v1281
        %v1349 = vpop.f32.mrb[0].mxu0
        %v1350 = vadd.f32 0.0, %v1349
        %v1351 = vpop.f32.mrb[0].mxu0
        %1352 = vdwg.mxu0
        %v1354 = vsel %vm463, %v1277, 0
        %1356 = vmatprep.subr.mxu0 0.0
        %1357 = vmatpush1.msra.mxu0 %v418
        %1358 = vmatprep.subr.mxu0 0.0
        %1359 = vmatpush1.msra.mxu0 %v419
        %1360 = vmatprep.subr.mxu0 0.0
        %1361 = vmatpush1.msra.mxu0 %v420
        %1362 = vmatprep.subr.mxu0 0.0
        %1363 = vmatpush1.msra.mxu0 %v421
        %1364 = vmatprep.subr.mxu0 0.0
        %1365 = vmatpush1.msra.mxu0 0.0
        %1366 = vmatprep.subr.mxu0 0.0
        %1367 = vmatpush1.msra.mxu0 0.0
        %1368 = vmatprep.subr.mxu0 0.0
        %1369 = vmatpush1.msra.mxu0 0.0
        %1370 = vmatprep.subr.mxu0 0.0
        %1371 = vmatpush1.msra.mxu0 0.0
        %1372 = vmatprep.subr.mxu0 0.0
        %1373 = vmatpush1.msra.mxu0 0.0
        %1374 = vmatprep.subr.mxu0 0.0
        %1375 = vmatpush1.msra.mxu0 0.0
        %1376 = vmatprep.subr.mxu0 0.0
        %1377 = vmatpush1.msra.mxu0 0.0
        %1378 = vmatprep.subr.mxu0 0.0
        %1379 = vmatpush1.msra.mxu0 0.0
        %1380 = vmatprep.subr.mxu0 0.0
        %1381 = vmatpush1.msra.mxu0 0.0
        %1382 = vmatprep.subr.mxu0 0.0
        %1383 = vmatpush1.msra.mxu0 0.0
        %1384 = vmatprep.subr.mxu0 0.0
        %1385 = vmatpush1.msra.mxu0 0.0
        %1386 = vmatprep.subr.mxu0 0.0
        %1387 = vmatpush1.msra.mxu0 0.0
        %1388 = vmatprep.subr.mxu0 0.0
        %1389 = vmatpush1.msra.mxu0 0.0
        %1390 = vmatprep.subr.mxu0 0.0
        %1391 = vmatpush1.msra.mxu0 0.0
        %1392 = vmatprep.subr.mxu0 0.0
        %1393 = vmatpush1.msra.mxu0 0.0
        %1394 = vmatprep.subr.mxu0 0.0
        %1395 = vmatpush1.msra.mxu0 0.0
        %1396 = vmatprep.subr.mxu0 0.0
        %1397 = vmatpush1.msra.mxu0 0.0
        %1398 = vmatprep.subr.mxu0 0.0
        %1399 = vmatpush1.msra.mxu0 0.0
        %1400 = vmatprep.subr.mxu0 0.0
        %1401 = vmatpush1.msra.mxu0 0.0
        %1402 = vmatprep.subr.mxu0 0.0
        %1403 = vmatpush1.msra.mxu0 0.0
        %1404 = vmatprep.subr.mxu0 0.0
        %1405 = vmatpush1.msra.mxu0 0.0
        %1406 = vmatprep.subr.mxu0 0.0
        %1407 = vmatpush1.msra.mxu0 0.0
        %1408 = vmatprep.subr.mxu0 0.0
        %1409 = vmatpush1.msra.mxu0 0.0
        %1410 = vmatprep.subr.mxu0 0.0
        %1411 = vmatpush1.msra.mxu0 0.0
        %1412 = vmatprep.subr.mxu0 0.0
        %1413 = vmatpush1.msra.mxu0 0.0
        %1414 = vmatprep.subr.mxu0 0.0
        %1415 = vmatpush1.msra.mxu0 0.0
        %1416 = vmatprep.subr.mxu0 0.0
        %1417 = vmatpush1.msra.mxu0 0.0
        %1418 = vmatprep.subr.mxu0 0.0
        %1419 = vmatpush1.msra.mxu0 0.0
        %1420 = vmatprep.mubr.f32.mxu0 0.0
        %1421 = vmatmul.mubr.f32.gmra.mrb[0].mxu0 %v1354
        %v1422 = vpop.f32.mrb[0].mxu0
        %v1423 = vadd.f32 %v1350, %v1422
        %v1424 = vpop.f32.mrb[0].mxu0
        %1425 = vdwg.mxu0
        %v1426 = vlaneseq
        %v1427 = vshrl.u32 %v1426, 7
        %v1428 = vsub.s32 0, %v1427
        %v1429 = vrot.slane %v458, %v1428
        %v1430 = vadd.f32 %v1423, %v1429
        %v1431 = vmax.f32 %v1430, 0.0
        %v1432 = vlaneseq
        %v1433 = vshrl.u32 %v1432, 7
        %v1434 = vsub.s32 1, %v1433
        %v1435 = vrot.slane %v458, %v1434
        %1436 = vmatprep.subr.mxu0 0.0
        %1437 = vmatpush1.msra.mxu0 %v426
        %1438 = vmatprep.subr.mxu0 0.0
        %1439 = vmatpush1.msra.mxu0 %v427
        %1440 = vmatprep.subr.mxu0 0.0
        %1441 = vmatpush1.msra.mxu0 %v428
        %1442 = vmatprep.subr.mxu0 0.0
        %1443 = vmatpush1.msra.mxu0 %v429
        %1444 = vmatprep.subr.mxu0 0.0
        %1445 = vmatpush1.msra.mxu0 %v430
        %1446 = vmatprep.subr.mxu0 0.0
        %1447 = vmatpush1.msra.mxu0 %v431
        %1448 = vmatprep.subr.mxu0 0.0
        %1449 = vmatpush1.msra.mxu0 %v432
        %1450 = vmatprep.subr.mxu0 0.0
        %1451 = vmatpush1.msra.mxu0 %v433
        %1452 = vmatprep.subr.mxu0 0.0
        %1453 = vmatpush1.msra.mxu0 %v434
        %1454 = vmatprep.subr.mxu0 0.0
        %1455 = vmatpush1.msra.mxu0 %v435
        %1456 = vmatprep.subr.mxu0 0.0
        %1457 = vmatpush1.msra.mxu0 %v436
        %1458 = vmatprep.subr.mxu0 0.0
        %1459 = vmatpush1.msra.mxu0 %v437
        %1460 = vmatprep.subr.mxu0 0.0
        %1461 = vmatpush1.msra.mxu0 %v438
        %1462 = vmatprep.subr.mxu0 0.0
        %1463 = vmatpush1.msra.mxu0 %v439
        %1464 = vmatprep.subr.mxu0 0.0
        %1465 = vmatpush1.msra.mxu0 %v440
        %1466 = vmatprep.subr.mxu0 0.0
        %1467 = vmatpush1.msra.mxu0 %v441
        %1468 = vmatprep.subr.mxu0 0.0
        %1469 = vmatpush1.msra.mxu0 0.0
        %1470 = vmatprep.subr.mxu0 0.0
        %1471 = vmatpush1.msra.mxu0 0.0
        %1472 = vmatprep.subr.mxu0 0.0
        %1473 = vmatpush1.msra.mxu0 0.0
        %1474 = vmatprep.subr.mxu0 0.0
        %1475 = vmatpush1.msra.mxu0 0.0
        %1476 = vmatprep.subr.mxu0 0.0
        %1477 = vmatpush1.msra.mxu0 0.0
        %1478 = vmatprep.subr.mxu0 0.0
        %1479 = vmatpush1.msra.mxu0 0.0
        %1480 = vmatprep.subr.mxu0 0.0
        %1481 = vmatpush1.msra.mxu0 0.0
        %1482 = vmatprep.subr.mxu0 0.0
        %1483 = vmatpush1.msra.mxu0 0.0
        %1484 = vmatprep.subr.mxu0 0.0
        %1485 = vmatpush1.msra.mxu0 0.0
        %1486 = vmatprep.subr.mxu0 0.0
        %1487 = vmatpush1.msra.mxu0 0.0
        %1488 = vmatprep.subr.mxu0 0.0
        %1489 = vmatpush1.msra.mxu0 0.0
        %1490 = vmatprep.subr.mxu0 0.0
        %1491 = vmatpush1.msra.mxu0 0.0
        %1492 = vmatprep.subr.mxu0 0.0
        %1493 = vmatpush1.msra.mxu0 0.0
        %1494 = vmatprep.subr.mxu0 0.0
        %1495 = vmatpush1.msra.mxu0 0.0
        %1496 = vmatprep.subr.mxu0 0.0
        %1497 = vmatpush1.msra.mxu0 0.0
        %1498 = vmatprep.subr.mxu0 0.0
        %1499 = vmatpush1.msra.mxu0 0.0
        %1500 = vmatprep.mubr.f32.mxu0 0.0
        %1501 = vmatmul.mubr.f32.gmra.mrb[0].mxu0 %v1431
        %v1502 = vpop.f32.mrb[0].mxu0
        %v1503 = vadd.f32 %v1435, %v1502
        %v1504 = vpop.f32.mrb[0].mxu0
        %1505 = vdwg.mxu0
        %v1506 = vmax.f32 %v1503, 0.0
        %v1507 = vlaneseq
        %v1508 = vshrl.u32 %v1507, 7
        %v1509 = vsub.s32 2, %v1508
        %v1510 = vrot.slane %v458, %v1509
        %1511 = vmatprep.subr.mxu0 0.0
        %1512 = vmatpush1.msra.mxu0 %v442
        %1513 = vmatprep.subr.mxu0 0.0
        %1514 = vmatpush1.msra.mxu0 %v443
        %1515 = vmatprep.subr.mxu0 0.0
        %1516 = vmatpush1.msra.mxu0 %v444
        %1517 = vmatprep.subr.mxu0 0.0
        %1518 = vmatpush1.msra.mxu0 %v445
        %1519 = vmatprep.subr.mxu0 0.0
        %1520 = vmatpush1.msra.mxu0 %v446
        %1521 = vmatprep.subr.mxu0 0.0
        %1522 = vmatpush1.msra.mxu0 %v447
        %1523 = vmatprep.subr.mxu0 0.0
        %1524 = vmatpush1.msra.mxu0 %v448
        %1525 = vmatprep.subr.mxu0 0.0
        %1526 = vmatpush1.msra.mxu0 %v449
        %1527 = vmatprep.subr.mxu0 0.0
        %1528 = vmatpush1.msra.mxu0 %v450
        %1529 = vmatprep.subr.mxu0 0.0
        %1530 = vmatpush1.msra.mxu0 %v451
        %1531 = vmatprep.subr.mxu0 0.0
        %1532 = vmatpush1.msra.mxu0 %v452
        %1533 = vmatprep.subr.mxu0 0.0
        %1534 = vmatpush1.msra.mxu0 %v453
        %1535 = vmatprep.subr.mxu0 0.0
        %1536 = vmatpush1.msra.mxu0 %v454
        %1537 = vmatprep.subr.mxu0 0.0
        %1538 = vmatpush1.msra.mxu0 %v455
        %1539 = vmatprep.subr.mxu0 0.0
        %1540 = vmatpush1.msra.mxu0 %v456
        %1541 = vmatprep.subr.mxu0 0.0
        %1542 = vmatpush1.msra.mxu0 %v457
        %1543 = vmatprep.subr.mxu0 0.0
        %1544 = vmatpush1.msra.mxu0 0.0
        %1545 = vmatprep.subr.mxu0 0.0
        %1546 = vmatpush1.msra.mxu0 0.0
        %1547 = vmatprep.subr.mxu0 0.0
        %1548 = vmatpush1.msra.mxu0 0.0
        %1549 = vmatprep.subr.mxu0 0.0
        %1550 = vmatpush1.msra.mxu0 0.0
        %1551 = vmatprep.subr.mxu0 0.0
        %1552 = vmatpush1.msra.mxu0 0.0
        %1553 = vmatprep.subr.mxu0 0.0
        %1554 = vmatpush1.msra.mxu0 0.0
        %1555 = vmatprep.subr.mxu0 0.0
        %1556 = vmatpush1.msra.mxu0 0.0
        %1557 = vmatprep.subr.mxu0 0.0
        %1558 = vmatpush1.msra.mxu0 0.0
        %1559 = vmatprep.subr.mxu0 0.0
        %1560 = vmatpush1.msra.mxu0 0.0
        %1561 = vmatprep.subr.mxu0 0.0
        %1562 = vmatpush1.msra.mxu0 0.0
        %1563 = vmatprep.subr.mxu0 0.0
        %1564 = vmatpush1.msra.mxu0 0.0
        %1565 = vmatprep.subr.mxu0 0.0
        %1566 = vmatpush1.msra.mxu0 0.0
        %1567 = vmatprep.subr.mxu0 0.0
        %1568 = vmatpush1.msra.mxu0 0.0
        %1569 = vmatprep.subr.mxu0 0.0
        %1570 = vmatpush1.msra.mxu0 0.0
        %1571 = vmatprep.subr.mxu0 0.0
        %1572 = vmatpush1.msra.mxu0 0.0
        %1573 = vmatprep.subr.mxu0 0.0
        %1574 = vmatpush1.msra.mxu0 0.0
        %1575 = vmatprep.mubr.f32.mxu0 0.0
        %1576 = vmatmul.mubr.f32.gmra.mrb[0].mxu0 %v1506
        %v1577 = vpop.f32.mrb[0].mxu0
        %v1578 = vadd.f32 %v1510, %v1577
        %v1579 = vpop.f32.mrb[0].mxu0
        %1580 = vdwg.mxu0
        %vm1581 = vcmask 1041408
        %v1582 = vsel %vm1581, %v1578, -inf
        %1583 = vmax.xlane.f32.xlu0 %v1582
        %v1584 = vpop.xlane.xlu0 %1583
        %v1585 = vsub.f32 %v1578, %v1584
        %v1586 = vmul.f32 %v1585, 1.442695
        %v1587 = vpow.pop %v1586
        %v1588 = vsel %vm1581, %v1587, 0.0
        %1589 = vadd.xlane.f32.xlu0 %v1588
        %v1590 = vpop.xlane.xlu0 %1589
        %v1591 = vlog2.pop %v1590
        %v1592 = vmul.f32 %v1591, 0.6931472
        %v1593 = vadd.f32 %v1584, %v1592
        %v1594 = vsub.f32 %v1578, %v1593
        %1595 = vst [vmem:[%s395] sm:$0x3] %v1594
        %s1596 = sand.u32 %s222, 1
        %s1597 = scalar_lea.sflag [#allocation4], %s1596
        %s1598 = sand.u32 %s222, 1
        %s1599 = smul.addr %s1598, 2
        %s1600 = scalar_lea.vmem [#allocation8], %s1599
        // Predicated region
        $region65: #{model_forward.1} parent=51 // pred_check
          %p1601 = pneg %p232
        $region66: #{model_forward.1} parent=51 // pred_check_branch
          %1603 = sbr.rel (%p1601) target = $region68
        $region67: #{model_forward.1} parent=51 // pred_region
          %s1605 = ssub.s32 32, 32
          %1606 = vsyncadd %s1597, %s1605
          %s1607 = smul.addr %s26, 32
          %s1608 = scalar_lea.hbm %s8, %s1607
          %s1610 = sshll.u32 %s1600, 4
          %s1611 = int_to_ptr.vmem [resolvable:$true] %s1610
          %1613 = dma.vmem_to_hbm [thread:$0]  %s1611, 32, %s1608, %s1597
        $region68: #{model_forward.1} parent=51 // pred_fallthru
          _
      $region52: #{model_forward.1} parent=5 // pred_fallthru
        _
      %p1614 = scmp.le.s32.totalorder 2, %s21
      // Predicated region
      $region69: #{model_forward.1} parent=5 // pred_check
        %p1615 = pneg %p1614
      $region70: #{model_forward.1} parent=5 // pred_check_branch
        %1617 = sbr.rel (%p1615) target = $region72
      $region71: #{model_forward.1} parent=5 // pred_region
        %s1618 = ssub.s32 %s21, 2
        // Predicated region
        $region73: #{model_forward.1} parent=71 // pred_check
          %p1619 = pneg %p238
        $region74: #{model_forward.1} parent=71 // pred_check_branch
          %1621 = sbr.rel (%p1619) target = $region76
        $region75: #{model_forward.1} parent=71 // pred_region
          %s1622 = sand.u32 %s223, 1
          %s1623 = scalar_lea.sflag [#allocation4], %s1622
          %s1624 = sand.u32 %s223, 1
          %s1625 = smul.addr %s1624, 2
          %s1626 = scalar_lea.vmem [#allocation8], %s1625
          %1627 = dma.done %s1623, 32
        $region76: #{model_forward.1} parent=71 // pred_fallthru
          _
      $region72: #{model_forward.1} parent=5 // pred_fallthru
        _
    $region6: #{model_forward.1} parent=1 // loop_footer
      %s25 = sadd.s32 1, %s21
    $region7: #{model_forward.1} parent=1 // loop_footer_branch
      %20 = sbr.rel target = $region3
    $region8: #{model_forward.1} parent=1 // loop_exit
      _
    %1628 = vsyncpa [#allocation3], 1
    %s1629 = scalar_lea.sflag [#allocation3], 1
    %1630 = vsyncpa %s1629, 1
    %1631 = vsyncpa [#allocation6], 1
    %1632 = vsyncpa [#allocation4], 1
    %s1633 = scalar_lea.sflag [#allocation4], 1
    %1634 = vsyncpa %s1633, 1

</llo_original>
